<compile_context>
chip_gen: v5e
topology: v5e:2x2
jax: 0.10.0
libtpu: 0.0.40
codegen_flags: <defaults>
</compile_context>

<pallas_src>
import jax
import jax.numpy as jnp
from jax.experimental import pallas as pl
from jax.experimental.pallas import tpu as pltpu


def _leaky_relu(v, slope=0.1):
    # Module uses LeakyReLU(0.1).
    return jnp.where(v > 0, v, slope * v)


def nlaeu_kernel(x_ref,
                 w1_ref, b1_ref, w2_ref, b2_ref, w3_ref, b3_ref, w4_ref, b4_ref,
                 wf_ref, bn1_ref, wn2_ref, bn2_ref,
                 out_x_ref, out_lat_ref):
    # Feature-major tile: (C, TILE_N), TILE_N on the lane axis.
    xT = x_ref[...]

    # --- encoder: Linear -> LeakyReLU(0.1) x3, then Linear to P ---
    h = _leaky_relu(jnp.dot(w1_ref[...], xT, preferred_element_type=jnp.float32)
                    + b1_ref[...])                                   # (128, TILE_N)
    h = _leaky_relu(jnp.dot(w2_ref[...], h, preferred_element_type=jnp.float32)
                    + b2_ref[...])                                   # (64, TILE_N)
    h = _leaky_relu(jnp.dot(w3_ref[...], h, preferred_element_type=jnp.float32)
                    + b3_ref[...])                                   # (16, TILE_N)
    lat = jnp.dot(w4_ref[...], h, preferred_element_type=jnp.float32) + b4_ref[...]
    # lat: (P, TILE_N)

    # --- abundance constraint: abs + per-pixel sum-to-one normalization ---
    lat = jnp.abs(lat)
    s = jnp.sum(lat, axis=0, keepdims=True)                          # (1, TILE_N)
    # NOTE: reference divides with no epsilon; keep identical semantics.
    lat = lat * pl.reciprocal(s, approx=False)

    # --- decoder: linear part folded into first nonlinear layer ---
    # Wn1 @ (Wd @ lat) + bn1  ==  (Wn1 @ Wd) @ lat + bn1,  wf = Wn1 @ Wd precomputed.
    h2 = jnp.dot(wf_ref[...], lat, preferred_element_type=jnp.float32) + bn1_ref[...]
    h2 = jax.nn.sigmoid(h2)                                          # (C, TILE_N)
    out = jnp.dot(wn2_ref[...], h2, preferred_element_type=jnp.float32) + bn2_ref[...]

    out_x_ref[...] = out                                             # (C, TILE_N)
    out_lat_ref[...] = lat                                           # (P, TILE_N)


def nlaeu_forward(x, params, *, tile_n=512):
    """x: (N, Channel) float32. Returns (x_recon (N, C), x_latent (N, P))."""
    N, C = x.shape
    P = params["w4"].shape[0]

    if tile_n >= N:
        tile_n = N
    assert N % tile_n == 0, "N must be divisible by tile_n"
    assert tile_n == N or tile_n % 128 == 0, "tile_n should be a multiple of 128"

    # Feature-major input; outputs are produced feature-major and transposed back.
    # TODO(synk): for very large N the wrapper-side transposes cost one extra
    # HBM pass each; they are kept because the lane-dense kernel layout was the
    # previously-requested optimization and the stores dominate inside the kernel.
    xT = jnp.transpose(x)                                            # (C, N)

    # Fold the bias-free linear decoder into the first nonlinear layer.
    wf = params["wn1"] @ params["wd"]                                # (C, P)

    def col(b):
        return b.reshape(-1, 1)                                      # (out, 1)

    weights = [params["w1"], col(params["b1"]),
               params["w2"], col(params["b2"]),
               params["w3"], col(params["b3"]),
               params["w4"], col(params["b4"]),
               wf, col(params["bn1"]),
               params["wn2"], col(params["bn2"])]

    def full_spec(a):
        # Weights/biases are tiny and grid-invariant: pass them untiled;
        # constant block index -> fetched once, VMEM resident across the grid.
        return pl.BlockSpec(a.shape, lambda i: (0,) * a.ndim)

    grid = (N // tile_n,)
    in_specs = ([pl.BlockSpec((C, tile_n), lambda i: (0, i))]
                + [full_spec(w) for w in weights])
    out_specs = [pl.BlockSpec((C, tile_n), lambda i: (0, i)),
                 pl.BlockSpec((P, tile_n), lambda i: (0, i))]

    out_xT, out_latT = pl.pallas_call(
        nlaeu_kernel,
        out_shape=(jax.ShapeDtypeStruct((C, N), jnp.float32),
                   jax.ShapeDtypeStruct((P, N), jnp.float32)),
        grid_spec=pltpu.PrefetchScalarGridSpec(
            num_scalar_prefetch=0,
            grid=grid,
            in_specs=in_specs,
            out_specs=out_specs,
        ),
        compiler_params=pltpu.CompilerParams(
            dimension_semantics=("parallel",)),
    )(xT, *weights)

    return jnp.transpose(out_xT), jnp.transpose(out_latT)


def init_params(key, P, C):
    """Deterministic synthetic params in PyTorch convention: W (out, in), b (out,)."""
    keys = jax.random.split(key, 13)
    s = 0.1

    def w(k, o, i):
        return (s * jax.random.normal(k, (o, i))).astype(jnp.float32)

    def b(k, o):
        return (s * jax.random.normal(k, (o,))).astype(jnp.float32)

    return {
        # encoder
        "w1": w(keys[0], 128, C),  "b1": b(keys[1], 128),
        "w2": w(keys[2], 64, 128), "b2": b(keys[3], 64),
        "w3": w(keys[4], 16, 64),  "b3": b(keys[5], 16),
        "w4": w(keys[6], P, 16),   "b4": b(keys[7], P),
        # decoder_linearpart (bias=False)
        "wd": w(keys[8], C, P),
        # decoder_nonlinearpart
        "wn1": w(keys[9], C, C),   "bn1": b(keys[10], C),
        "wn2": w(keys[11], C, C),  "bn2": b(keys[12], C),
    }


def nlaeu_reference(x, p):
    """Plain-JAX reference mirroring the PyTorch module (y = x @ W^T + b)."""
    h = _leaky_relu(x @ p["w1"].T + p["b1"])
    h = _leaky_relu(h @ p["w2"].T + p["b2"])
    h = _leaky_relu(h @ p["w3"].T + p["b3"])
    lat = jnp.abs(h @ p["w4"].T + p["b4"])
    lat = lat / jnp.sum(lat, axis=1, keepdims=True)
    x_lin = lat @ p["wd"].T
    h2 = jax.nn.sigmoid(x_lin @ p["wn1"].T + p["bn1"])
    out = h2 @ p["wn2"].T + p["bn2"]
    return out, lat


if __name__ == "__main__":
    key = jax.random.PRNGKey(0)
    k_param, k_x = jax.random.split(key)

    P = 4          # number of endmembers (latent abundances)
    Channel = 32   # spectral bands
    N = 1024       # number of pixels (2 grid steps of 512 -> both v7x TCs busy)

    params = init_params(k_param, P, Channel)
    x = jax.random.uniform(k_x, (N, Channel), dtype=jnp.float32)

    out_x, out_lat = nlaeu_forward(x, params, tile_n=512)
    out_x = jax.block_until_ready(out_x)
    out_lat = jax.block_until_ready(out_lat)

    ref_x, ref_lat = nlaeu_reference(x, params)
    assert jnp.allclose(out_x, ref_x, atol=1e-4, rtol=1e-4)
    assert jnp.allclose(out_lat, ref_lat, atol=1e-4, rtol=1e-4)
    # latent rows should sum to 1
    assert jnp.allclose(jnp.sum(out_lat, axis=1), 1.0, atol=1e-5)

    print("KERNEL_OK")
</pallas_src>

<mosaic_0001>
module attributes {stable_mosaic.version = 11 : i64} {
  func.func @nlaeu_kernel(%arg0: i32, %arg1: memref<32x512xf32, #tpu.memory_space<vmem>>, %arg2: memref<128x32xf32, #tpu.memory_space<vmem>>, %arg3: memref<128x1xf32, #tpu.memory_space<vmem>>, %arg4: memref<64x128xf32, #tpu.memory_space<vmem>>, %arg5: memref<64x1xf32, #tpu.memory_space<vmem>>, %arg6: memref<16x64xf32, #tpu.memory_space<vmem>>, %arg7: memref<16x1xf32, #tpu.memory_space<vmem>>, %arg8: memref<4x16xf32, #tpu.memory_space<vmem>>, %arg9: memref<4x1xf32, #tpu.memory_space<vmem>>, %arg10: memref<32x4xf32, #tpu.memory_space<vmem>>, %arg11: memref<32x1xf32, #tpu.memory_space<vmem>>, %arg12: memref<32x32xf32, #tpu.memory_space<vmem>>, %arg13: memref<32x1xf32, #tpu.memory_space<vmem>>, %arg14: memref<32x512xf32, #tpu.memory_space<vmem>>, %arg15: memref<4x512xf32, #tpu.memory_space<vmem>>) attributes {dimension_semantics = [#tpu.dimension_semantics<parallel>], iteration_bounds = array<i64: 2>, scalar_prefetch = 0 : i64, scratch_operands = 0 : i64, tpu.core_type = #tpu.core_type<tc>, window_params = [{transform_indices = @transform_0, window_bounds = array<i64: 32, 512>}, {pipeline_mode = #tpu.pipeline_mode<synchronous>, transform_indices = @transform_1, window_bounds = array<i64: 128, 32>}, {pipeline_mode = #tpu.pipeline_mode<synchronous>, transform_indices = @transform_2, window_bounds = array<i64: 128, 1>}, {pipeline_mode = #tpu.pipeline_mode<synchronous>, transform_indices = @transform_3, window_bounds = array<i64: 64, 128>}, {pipeline_mode = #tpu.pipeline_mode<synchronous>, transform_indices = @transform_4, window_bounds = array<i64: 64, 1>}, {pipeline_mode = #tpu.pipeline_mode<synchronous>, transform_indices = @transform_5, window_bounds = array<i64: 16, 64>}, {pipeline_mode = #tpu.pipeline_mode<synchronous>, transform_indices = @transform_6, window_bounds = array<i64: 16, 1>}, {pipeline_mode = #tpu.pipeline_mode<synchronous>, transform_indices = @transform_7, window_bounds = array<i64: 4, 16>}, {pipeline_mode = #tpu.pipeline_mode<synchronous>, transform_indices = @transform_8, window_bounds = array<i64: 4, 1>}, {pipeline_mode = #tpu.pipeline_mode<synchronous>, transform_indices = @transform_9, window_bounds = array<i64: 32, 4>}, {pipeline_mode = #tpu.pipeline_mode<synchronous>, transform_indices = @transform_10, window_bounds = array<i64: 32, 1>}, {pipeline_mode = #tpu.pipeline_mode<synchronous>, transform_indices = @transform_11, window_bounds = array<i64: 32, 32>}, {pipeline_mode = #tpu.pipeline_mode<synchronous>, transform_indices = @transform_12, window_bounds = array<i64: 32, 1>}, {transform_indices = @transform_13, window_bounds = array<i64: 32, 512>}, {transform_indices = @transform_14, window_bounds = array<i64: 4, 512>}]} {
    %c0 = arith.constant 0 : index
    %c0_0 = arith.constant 0 : index
    %0 = vector.load %arg1[%c0, %c0_0] : memref<32x512xf32, #tpu.memory_space<vmem>>, vector<32x512xf32>
    %c0_1 = arith.constant 0 : index
    %c0_2 = arith.constant 0 : index
    %1 = vector.load %arg2[%c0_1, %c0_2] : memref<128x32xf32, #tpu.memory_space<vmem>>, vector<128x32xf32>
    %cst = arith.constant dense<0.000000e+00> : vector<128x512xf32>
    %2 = tpu.matmul %1, %0, %cst {dimension_numbers = #tpu.dot_dimension_numbers<[1], [0], [0], [1], [0, 0, 1, 1], [], []>} : vector<128x32xf32>, vector<32x512xf32>, vector<128x512xf32> -> vector<128x512xf32>
    %c0_3 = arith.constant 0 : index
    %c0_4 = arith.constant 0 : index
    %3 = vector.load %arg3[%c0_3, %c0_4] : memref<128x1xf32, #tpu.memory_space<vmem>>, vector<128x1xf32>
    %4 = vector.broadcast %3 : vector<128x1xf32> to vector<128x512xf32>
    %5 = arith.addf %2, %4 : vector<128x512xf32>
    %cst_5 = arith.constant 0.000000e+00 : f32
    %6 = vector.broadcast %cst_5 : f32 to vector<128x512xf32>
    %7 = arith.cmpf ogt, %5, %6 : vector<128x512xf32>
    %cst_6 = arith.constant 1.000000e-01 : f32
    %8 = vector.broadcast %cst_6 : f32 to vector<128x512xf32>
    %9 = arith.mulf %8, %5 : vector<128x512xf32>
    %10 = arith.select %7, %5, %9 : vector<128x512xi1>, vector<128x512xf32>
    %c0_7 = arith.constant 0 : index
    %c0_8 = arith.constant 0 : index
    %11 = vector.load %arg4[%c0_7, %c0_8] : memref<64x128xf32, #tpu.memory_space<vmem>>, vector<64x128xf32>
    %cst_9 = arith.constant dense<0.000000e+00> : vector<64x512xf32>
    %12 = tpu.matmul %11, %10, %cst_9 {dimension_numbers = #tpu.dot_dimension_numbers<[1], [0], [0], [1], [0, 0, 1, 1], [], []>} : vector<64x128xf32>, vector<128x512xf32>, vector<64x512xf32> -> vector<64x512xf32>
    %c0_10 = arith.constant 0 : index
    %c0_11 = arith.constant 0 : index
    %13 = vector.load %arg5[%c0_10, %c0_11] : memref<64x1xf32, #tpu.memory_space<vmem>>, vector<64x1xf32>
    %14 = vector.broadcast %13 : vector<64x1xf32> to vector<64x512xf32>
    %15 = arith.addf %12, %14 : vector<64x512xf32>
    %cst_12 = arith.constant 0.000000e+00 : f32
    %16 = vector.broadcast %cst_12 : f32 to vector<64x512xf32>
    %17 = arith.cmpf ogt, %15, %16 : vector<64x512xf32>
    %cst_13 = arith.constant 1.000000e-01 : f32
    %18 = vector.broadcast %cst_13 : f32 to vector<64x512xf32>
    %19 = arith.mulf %18, %15 : vector<64x512xf32>
    %20 = arith.select %17, %15, %19 : vector<64x512xi1>, vector<64x512xf32>
    %c0_14 = arith.constant 0 : index
    %c0_15 = arith.constant 0 : index
    %21 = vector.load %arg6[%c0_14, %c0_15] : memref<16x64xf32, #tpu.memory_space<vmem>>, vector<16x64xf32>
    %cst_16 = arith.constant dense<0.000000e+00> : vector<16x512xf32>
    %22 = tpu.matmul %21, %20, %cst_16 {dimension_numbers = #tpu.dot_dimension_numbers<[1], [0], [0], [1], [0, 0, 1, 1], [], []>} : vector<16x64xf32>, vector<64x512xf32>, vector<16x512xf32> -> vector<16x512xf32>
    %c0_17 = arith.constant 0 : index
    %c0_18 = arith.constant 0 : index
    %23 = vector.load %arg7[%c0_17, %c0_18] : memref<16x1xf32, #tpu.memory_space<vmem>>, vector<16x1xf32>
    %24 = vector.broadcast %23 : vector<16x1xf32> to vector<16x512xf32>
    %25 = arith.addf %22, %24 : vector<16x512xf32>
    %cst_19 = arith.constant 0.000000e+00 : f32
    %26 = vector.broadcast %cst_19 : f32 to vector<16x512xf32>
    %27 = arith.cmpf ogt, %25, %26 : vector<16x512xf32>
    %cst_20 = arith.constant 1.000000e-01 : f32
    %28 = vector.broadcast %cst_20 : f32 to vector<16x512xf32>
    %29 = arith.mulf %28, %25 : vector<16x512xf32>
    %30 = arith.select %27, %25, %29 : vector<16x512xi1>, vector<16x512xf32>
    %c0_21 = arith.constant 0 : index
    %c0_22 = arith.constant 0 : index
    %31 = vector.load %arg8[%c0_21, %c0_22] : memref<4x16xf32, #tpu.memory_space<vmem>>, vector<4x16xf32>
    %cst_23 = arith.constant dense<0.000000e+00> : vector<4x512xf32>
    %32 = tpu.matmul %31, %30, %cst_23 {dimension_numbers = #tpu.dot_dimension_numbers<[1], [0], [0], [1], [0, 0, 1, 1], [], []>} : vector<4x16xf32>, vector<16x512xf32>, vector<4x512xf32> -> vector<4x512xf32>
    %c0_24 = arith.constant 0 : index
    %c0_25 = arith.constant 0 : index
    %33 = vector.load %arg9[%c0_24, %c0_25] : memref<4x1xf32, #tpu.memory_space<vmem>>, vector<4x1xf32>
    %34 = vector.broadcast %33 : vector<4x1xf32> to vector<4x512xf32>
    %35 = arith.addf %32, %34 : vector<4x512xf32>
    %36 = math.absf %35 : vector<4x512xf32>
    %cst_26 = arith.constant dense<0.000000e+00> : vector<512xf32>
    %37 = vector.multi_reduction <add>, %36, %cst_26 [0] : vector<4x512xf32> to vector<512xf32>
    %38 = vector.shape_cast %37 : vector<512xf32> to vector<1x512xf32>
    %39 = tpu.reciprocal %38 : vector<1x512xf32> -> vector<1x512xf32>
    %40 = vector.broadcast %39 : vector<1x512xf32> to vector<4x512xf32>
    %41 = arith.mulf %36, %40 : vector<4x512xf32>
    %c0_27 = arith.constant 0 : index
    %c0_28 = arith.constant 0 : index
    %42 = vector.load %arg10[%c0_27, %c0_28] : memref<32x4xf32, #tpu.memory_space<vmem>>, vector<32x4xf32>
    %cst_29 = arith.constant dense<0.000000e+00> : vector<32x512xf32>
    %43 = tpu.matmul %42, %41, %cst_29 {dimension_numbers = #tpu.dot_dimension_numbers<[1], [0], [0], [1], [0, 0, 1, 1], [], []>} : vector<32x4xf32>, vector<4x512xf32>, vector<32x512xf32> -> vector<32x512xf32>
    %c0_30 = arith.constant 0 : index
    %c0_31 = arith.constant 0 : index
    %44 = vector.load %arg11[%c0_30, %c0_31] : memref<32x1xf32, #tpu.memory_space<vmem>>, vector<32x1xf32>
    %45 = vector.broadcast %44 : vector<32x1xf32> to vector<32x512xf32>
    %46 = arith.addf %43, %45 : vector<32x512xf32>
    %47 = arith.negf %46 : vector<32x512xf32>
    %48 = math.exp %47 : vector<32x512xf32>
    %cst_32 = arith.constant 1.000000e+00 : f32
    %49 = vector.broadcast %cst_32 : f32 to vector<32x512xf32>
    %50 = arith.addf %49, %48 : vector<32x512xf32>
    %51 = arith.divf %49, %50 : vector<32x512xf32>
    %c0_33 = arith.constant 0 : index
    %c0_34 = arith.constant 0 : index
    %52 = vector.load %arg12[%c0_33, %c0_34] : memref<32x32xf32, #tpu.memory_space<vmem>>, vector<32x32xf32>
    %cst_35 = arith.constant dense<0.000000e+00> : vector<32x512xf32>
    %53 = tpu.matmul %52, %51, %cst_35 {dimension_numbers = #tpu.dot_dimension_numbers<[1], [0], [0], [1], [0, 0, 1, 1], [], []>} : vector<32x32xf32>, vector<32x512xf32>, vector<32x512xf32> -> vector<32x512xf32>
    %c0_36 = arith.constant 0 : index
    %c0_37 = arith.constant 0 : index
    %54 = vector.load %arg13[%c0_36, %c0_37] : memref<32x1xf32, #tpu.memory_space<vmem>>, vector<32x1xf32>
    %55 = vector.broadcast %54 : vector<32x1xf32> to vector<32x512xf32>
    %56 = arith.addf %53, %55 : vector<32x512xf32>
    %c0_38 = arith.constant 0 : index
    %c0_39 = arith.constant 0 : index
    %57 = vector.load %arg14[%c0_38, %c0_39] : memref<32x512xf32, #tpu.memory_space<vmem>>, vector<32x512xf32>
    tpu.vector_store %arg14[%c0_38, %c0_39], %56 {strides = array<i32>} : memref<32x512xf32, #tpu.memory_space<vmem>>, vector<32x512xf32>,
    %c0_40 = arith.constant 0 : index
    %c0_41 = arith.constant 0 : index
    %58 = vector.load %arg15[%c0_40, %c0_41] : memref<4x512xf32, #tpu.memory_space<vmem>>, vector<4x512xf32>
    tpu.vector_store %arg15[%c0_40, %c0_41], %41 {strides = array<i32>} : memref<4x512xf32, #tpu.memory_space<vmem>>, vector<4x512xf32>,
    return
  }
  func.func @transform_0(%arg0: i32) -> (i32, i32) {
    %c0_i32 = arith.constant 0 : i32
    %c0_i32_0 = arith.constant 0 : i32
    return %c0_i32, %arg0 : i32, i32
  }
  func.func @transform_1(%arg0: i32) -> (i32, i32) {
    %c0_i32 = arith.constant 0 : i32
    %c0_i32_0 = arith.constant 0 : i32
    %c0_i32_1 = arith.constant 0 : i32
    return %c0_i32, %c0_i32_0 : i32, i32
  }
  func.func @transform_2(%arg0: i32) -> (i32, i32) {
    %c0_i32 = arith.constant 0 : i32
    %c0_i32_0 = arith.constant 0 : i32
    %c0_i32_1 = arith.constant 0 : i32
    return %c0_i32, %c0_i32_0 : i32, i32
  }
  func.func @transform_3(%arg0: i32) -> (i32, i32) {
    %c0_i32 = arith.constant 0 : i32
    %c0_i32_0 = arith.constant 0 : i32
    %c0_i32_1 = arith.constant 0 : i32
    return %c0_i32, %c0_i32_0 : i32, i32
  }
  func.func @transform_4(%arg0: i32) -> (i32, i32) {
    %c0_i32 = arith.constant 0 : i32
    %c0_i32_0 = arith.constant 0 : i32
    %c0_i32_1 = arith.constant 0 : i32
    return %c0_i32, %c0_i32_0 : i32, i32
  }
  func.func @transform_5(%arg0: i32) -> (i32, i32) {
    %c0_i32 = arith.constant 0 : i32
    %c0_i32_0 = arith.constant 0 : i32
    %c0_i32_1 = arith.constant 0 : i32
    return %c0_i32, %c0_i32_0 : i32, i32
  }
  func.func @transform_6(%arg0: i32) -> (i32, i32) {
    %c0_i32 = arith.constant 0 : i32
    %c0_i32_0 = arith.constant 0 : i32
    %c0_i32_1 = arith.constant 0 : i32
    return %c0_i32, %c0_i32_0 : i32, i32
  }
  func.func @transform_7(%arg0: i32) -> (i32, i32) {
    %c0_i32 = arith.constant 0 : i32
    %c0_i32_0 = arith.constant 0 : i32
    %c0_i32_1 = arith.constant 0 : i32
    return %c0_i32, %c0_i32_0 : i32, i32
  }
  func.func @transform_8(%arg0: i32) -> (i32, i32) {
    %c0_i32 = arith.constant 0 : i32
    %c0_i32_0 = arith.constant 0 : i32
    %c0_i32_1 = arith.constant 0 : i32
    return %c0_i32, %c0_i32_0 : i32, i32
  }
  func.func @transform_9(%arg0: i32) -> (i32, i32) {
    %c0_i32 = arith.constant 0 : i32
    %c0_i32_0 = arith.constant 0 : i32
    %c0_i32_1 = arith.constant 0 : i32
    return %c0_i32, %c0_i32_0 : i32, i32
  }
  func.func @transform_10(%arg0: i32) -> (i32, i32) {
    %c0_i32 = arith.constant 0 : i32
    %c0_i32_0 = arith.constant 0 : i32
    %c0_i32_1 = arith.constant 0 : i32
    return %c0_i32, %c0_i32_0 : i32, i32
  }
  func.func @transform_11(%arg0: i32) -> (i32, i32) {
    %c0_i32 = arith.constant 0 : i32
    %c0_i32_0 = arith.constant 0 : i32
    %c0_i32_1 = arith.constant 0 : i32
    return %c0_i32, %c0_i32_0 : i32, i32
  }
  func.func @transform_12(%arg0: i32) -> (i32, i32) {
    %c0_i32 = arith.constant 0 : i32
    %c0_i32_0 = arith.constant 0 : i32
    %c0_i32_1 = arith.constant 0 : i32
    return %c0_i32, %c0_i32_0 : i32, i32
  }
  func.func @transform_13(%arg0: i32) -> (i32, i32) {
    %c0_i32 = arith.constant 0 : i32
    %c0_i32_0 = arith.constant 0 : i32
    return %c0_i32, %arg0 : i32, i32
  }
  func.func @transform_14(%arg0: i32) -> (i32, i32) {
    %c0_i32 = arith.constant 0 : i32
    %c0_i32_0 = arith.constant 0 : i32
    return %c0_i32, %arg0 : i32, i32
  }
}

</mosaic_0001>

<llo_original>
// kernel: tpu_custom_call.1
$region0: #{tpu_custom_call.1}
  #allocation0 [shape = 'u32[]', space=smem, size = 0x4, offset = 0x4, fixed_abs, tag = 'smem constant byte address 0x4 - core index']
  #allocation1 [shape = 'u32[72,128]{1,0:T(1,128)}', space=vmem, size = 0x9000, scoped, tag = 'internal scratch']
  %s0 = inlined_call_operand.vmem [shape: f32[32,1024], index: 0, kind: input, shape index: {}]
  %s1 = inlined_call_operand.vmem [shape: f32[128,32], index: 1, kind: input, shape index: {}]
  %s2 = inlined_call_operand.vmem [shape: f32[128,1], index: 2, kind: input, shape index: {}]
  %s3 = inlined_call_operand.vmem [shape: f32[64,128], index: 3, kind: input, shape index: {}]
  %s4 = inlined_call_operand.vmem [shape: f32[64,1], index: 4, kind: input, shape index: {}]
  %s5 = inlined_call_operand.vmem [shape: f32[16,64], index: 5, kind: input, shape index: {}]
  %s6 = inlined_call_operand.vmem [shape: f32[16,1], index: 6, kind: input, shape index: {}]
  %s7 = inlined_call_operand.vmem [shape: f32[4,16], index: 7, kind: input, shape index: {}]
  %s8 = inlined_call_operand.vmem [shape: f32[4,1], index: 8, kind: input, shape index: {}]
  %s9 = inlined_call_operand.vmem [shape: f32[32,4], index: 9, kind: input, shape index: {}]
  %s10 = inlined_call_operand.vmem [shape: f32[32,1], index: 10, kind: input, shape index: {}]
  %s11 = inlined_call_operand.vmem [shape: f32[32,32], index: 11, kind: input, shape index: {}]
  %s12 = inlined_call_operand.vmem [shape: f32[32,1], index: 12, kind: input, shape index: {}]
  %s13 = inlined_call_operand.hbm [shape: f32[32,1024], index: 13, kind: output, shape index: {0}]
  %s14 = inlined_call_operand.hbm [shape: f32[4,1024], index: 14, kind: output, shape index: {1}]
  %15 = xla_tuple %s13, %s14
  %s16 = sld [smem:[#allocation0]]
  $region116: #{tpu_custom_call.1} parent=0
    _
  %s18 = ssub.s32 1, %s16
  %s19 = scalar_select 0, %s18, %s16
  $region1: #{tpu_custom_call.1} parent=0
    #allocation2 [shape = 'u8[131072]{0}', space=vmem, size = 0x20000, scoped, tag = 'input window, operand 0']
    #allocation3 [shape = 'u8[131072]{0}', space=vmem, size = 0x20000, scoped, tag = 'output window, operand 0']
    #allocation4 [shape = 's32[2]{0}', space=sflag, size = 0x8, scoped, tag = 'scoped memory for tpu_custom_call.1']
    #allocation5 [shape = 'u8[16384]{0}', space=vmem, size = 0x4000, scoped, tag = 'output window, operand 1']
    #allocation6 [shape = 's32[2]{0}', space=sflag, size = 0x8, scoped, tag = 'scoped memory for tpu_custom_call.1']
    %20 = vsyncpa [#allocation4], 0
    %s21 = scalar_lea.sflag [#allocation4], 1
    %22 = vsyncpa %s21, 0
    %23 = vsyncpa [#allocation6], 0
    %s24 = scalar_lea.sflag [#allocation6], 1
    %25 = vsyncpa %s24, 0
    loop: start=0, step=1, limit=4
    $region2: #{tpu_custom_call.1} parent=1 // loop_pre_header
      _
    $region3: #{tpu_custom_call.1} parent=1 // loop_header
      %s27 = sphi 0, %s31
      %p28 = scmp.ge.s32.totalorder %s27, 4
      %s37 = sphi 0, %s39
      %s40 = sphi 0, %s37
      %s41 = sphi 0, %s40
      %s57 = sphi 0, %s41
      %s61 = sphi 0, %s61
      %s63 = sphi 0, %s61
      %s64 = sphi 0, %s63
      %s78 = sphi 0, %s64
      %s82 = sphi 0, %s82
      %s84 = sphi 0, %s82
      %s85 = sphi 0, %s84
      %s99 = sphi 0, %s85
      %s103 = sphi 0, %s103
      %s105 = sphi 0, %s103
      %s106 = sphi 0, %s105
      %s120 = sphi 0, %s106
      %s124 = sphi 0, %s124
      %s126 = sphi 0, %s124
      %s127 = sphi 0, %s126
      %s141 = sphi 0, %s127
      %s145 = sphi 0, %s145
      %s147 = sphi 0, %s145
      %s148 = sphi 0, %s147
      %s162 = sphi 0, %s148
      %s166 = sphi 0, %s166
      %s168 = sphi 0, %s166
      %s169 = sphi 0, %s168
      %s183 = sphi 0, %s169
      %s187 = sphi 0, %s187
      %s189 = sphi 0, %s187
      %s190 = sphi 0, %s189
      %s204 = sphi 0, %s190
      %s208 = sphi 0, %s208
      %s210 = sphi 0, %s208
      %s211 = sphi 0, %s210
      %s225 = sphi 0, %s211
      %s229 = sphi 0, %s229
      %s231 = sphi 0, %s229
      %s232 = sphi 0, %s231
      %s246 = sphi 0, %s232
      %s250 = sphi 0, %s250
      %s252 = sphi 0, %s250
      %s253 = sphi 0, %s252
      %s267 = sphi 0, %s253
      %s271 = sphi 0, %s271
      %s273 = sphi 0, %s271
      %s274 = sphi 0, %s273
      %s288 = sphi 0, %s274
      %s292 = sphi 0, %s292
      %s294 = sphi 0, %s292
      %s295 = sphi 0, %s294
      %s309 = sphi 0, %s295
      %s315 = sphi 0, %s317
      %s318 = sphi 0, %s315
      %s319 = sphi 0, %s318
      %s335 = sphi 0, %s319
      %s341 = sphi 0, %s343
      %s344 = sphi 0, %s341
      %s345 = sphi 0, %s344
      %s361 = sphi 0, %s345
    $region4: #{tpu_custom_call.1} parent=1 // loop_header_branch
      %30 = sbr.rel (%p28) target = $region8
    $region5: #{tpu_custom_call.1} parent=1 // loop_body
      %s32 = ssub.s32 %s27, 1
      %s33 = ssub.s32 %s27, 2
      %s34 = sadd.s32 %s27, 1
      %s35 = ssub.s32 %s27, %s34
      %p36 = scmp.eq.s32.totalorder %s35, 0
      %s38 = sadd.s32 %s37, 1
      %s39 = scalar_select %p36, %s37, %s38
      %p42 = pneg %p36
      %p43 = scmp.eq.s32.totalorder %s27, 1
      %p44 = por %p42, %p43
      %p45 = scmp.ne.s32.totalorder %s37, %s40
      %p46 = scmp.eq.s32.totalorder %s27, 0
      %p47 = por %p45, %p46
      %p48 = scmp.ne.s32.totalorder %s37, %s40
      %p49 = scmp.eq.s32.totalorder %s32, 1
      %p50 = por %p48, %p49
      %p51 = scmp.ne.s32.totalorder %s40, %s41
      %p52 = scmp.eq.s32.totalorder %s32, 0
      %p53 = por %p51, %p52
      %p54 = scmp.ne.s32.totalorder %s40, %s41
      %p55 = scmp.eq.s32.totalorder %s33, 1
      %p56 = por %p54, %p55
      %p58 = scmp.ne.s32.totalorder %s41, %s57
      %p59 = scmp.eq.s32.totalorder %s33, 0
      %p60 = por %p58, %p59
      %s62 = sadd.s32 %s61, 1
      %p65 = scmp.eq.s32.totalorder %s27, 1
      %p66 = scmp.ne.s32.totalorder %s61, %s63
      %p67 = scmp.eq.s32.totalorder %s27, 0
      %p68 = por %p66, %p67
      %p69 = scmp.ne.s32.totalorder %s61, %s63
      %p70 = scmp.eq.s32.totalorder %s32, 1
      %p71 = por %p69, %p70
      %p72 = scmp.ne.s32.totalorder %s63, %s64
      %p73 = scmp.eq.s32.totalorder %s32, 0
      %p74 = por %p72, %p73
      %p75 = scmp.ne.s32.totalorder %s63, %s64
      %p76 = scmp.eq.s32.totalorder %s33, 1
      %p77 = por %p75, %p76
      %p79 = scmp.ne.s32.totalorder %s64, %s78
      %p80 = scmp.eq.s32.totalorder %s33, 0
      %p81 = por %p79, %p80
      %s83 = sadd.s32 %s82, 1
      %p86 = scmp.eq.s32.totalorder %s27, 1
      %p87 = scmp.ne.s32.totalorder %s82, %s84
      %p88 = scmp.eq.s32.totalorder %s27, 0
      %p89 = por %p87, %p88
      %p90 = scmp.ne.s32.totalorder %s82, %s84
      %p91 = scmp.eq.s32.totalorder %s32, 1
      %p92 = por %p90, %p91
      %p93 = scmp.ne.s32.totalorder %s84, %s85
      %p94 = scmp.eq.s32.totalorder %s32, 0
      %p95 = por %p93, %p94
      %p96 = scmp.ne.s32.totalorder %s84, %s85
      %p97 = scmp.eq.s32.totalorder %s33, 1
      %p98 = por %p96, %p97
      %p100 = scmp.ne.s32.totalorder %s85, %s99
      %p101 = scmp.eq.s32.totalorder %s33, 0
      %p102 = por %p100, %p101
      %s104 = sadd.s32 %s103, 1
      %p107 = scmp.eq.s32.totalorder %s27, 1
      %p108 = scmp.ne.s32.totalorder %s103, %s105
      %p109 = scmp.eq.s32.totalorder %s27, 0
      %p110 = por %p108, %p109
      %p111 = scmp.ne.s32.totalorder %s103, %s105
      %p112 = scmp.eq.s32.totalorder %s32, 1
      %p113 = por %p111, %p112
      %p114 = scmp.ne.s32.totalorder %s105, %s106
      %p115 = scmp.eq.s32.totalorder %s32, 0
      %p116 = por %p114, %p115
      %p117 = scmp.ne.s32.totalorder %s105, %s106
      %p118 = scmp.eq.s32.totalorder %s33, 1
      %p119 = por %p117, %p118
      %p121 = scmp.ne.s32.totalorder %s106, %s120
      %p122 = scmp.eq.s32.totalorder %s33, 0
      %p123 = por %p121, %p122
      %s125 = sadd.s32 %s124, 1
      %p128 = scmp.eq.s32.totalorder %s27, 1
      %p129 = scmp.ne.s32.totalorder %s124, %s126
      %p130 = scmp.eq.s32.totalorder %s27, 0
      %p131 = por %p129, %p130
      %p132 = scmp.ne.s32.totalorder %s124, %s126
      %p133 = scmp.eq.s32.totalorder %s32, 1
      %p134 = por %p132, %p133
      %p135 = scmp.ne.s32.totalorder %s126, %s127
      %p136 = scmp.eq.s32.totalorder %s32, 0
      %p137 = por %p135, %p136
      %p138 = scmp.ne.s32.totalorder %s126, %s127
      %p139 = scmp.eq.s32.totalorder %s33, 1
      %p140 = por %p138, %p139
      %p142 = scmp.ne.s32.totalorder %s127, %s141
      %p143 = scmp.eq.s32.totalorder %s33, 0
      %p144 = por %p142, %p143
      %s146 = sadd.s32 %s145, 1
      %p149 = scmp.eq.s32.totalorder %s27, 1
      %p150 = scmp.ne.s32.totalorder %s145, %s147
      %p151 = scmp.eq.s32.totalorder %s27, 0
      %p152 = por %p150, %p151
      %p153 = scmp.ne.s32.totalorder %s145, %s147
      %p154 = scmp.eq.s32.totalorder %s32, 1
      %p155 = por %p153, %p154
      %p156 = scmp.ne.s32.totalorder %s147, %s148
      %p157 = scmp.eq.s32.totalorder %s32, 0
      %p158 = por %p156, %p157
      %p159 = scmp.ne.s32.totalorder %s147, %s148
      %p160 = scmp.eq.s32.totalorder %s33, 1
      %p161 = por %p159, %p160
      %p163 = scmp.ne.s32.totalorder %s148, %s162
      %p164 = scmp.eq.s32.totalorder %s33, 0
      %p165 = por %p163, %p164
      %s167 = sadd.s32 %s166, 1
      %p170 = scmp.eq.s32.totalorder %s27, 1
      %p171 = scmp.ne.s32.totalorder %s166, %s168
      %p172 = scmp.eq.s32.totalorder %s27, 0
      %p173 = por %p171, %p172
      %p174 = scmp.ne.s32.totalorder %s166, %s168
      %p175 = scmp.eq.s32.totalorder %s32, 1
      %p176 = por %p174, %p175
      %p177 = scmp.ne.s32.totalorder %s168, %s169
      %p178 = scmp.eq.s32.totalorder %s32, 0
      %p179 = por %p177, %p178
      %p180 = scmp.ne.s32.totalorder %s168, %s169
      %p181 = scmp.eq.s32.totalorder %s33, 1
      %p182 = por %p180, %p181
      %p184 = scmp.ne.s32.totalorder %s169, %s183
      %p185 = scmp.eq.s32.totalorder %s33, 0
      %p186 = por %p184, %p185
      %s188 = sadd.s32 %s187, 1
      %p191 = scmp.eq.s32.totalorder %s27, 1
      %p192 = scmp.ne.s32.totalorder %s187, %s189
      %p193 = scmp.eq.s32.totalorder %s27, 0
      %p194 = por %p192, %p193
      %p195 = scmp.ne.s32.totalorder %s187, %s189
      %p196 = scmp.eq.s32.totalorder %s32, 1
      %p197 = por %p195, %p196
      %p198 = scmp.ne.s32.totalorder %s189, %s190
      %p199 = scmp.eq.s32.totalorder %s32, 0
      %p200 = por %p198, %p199
      %p201 = scmp.ne.s32.totalorder %s189, %s190
      %p202 = scmp.eq.s32.totalorder %s33, 1
      %p203 = por %p201, %p202
      %p205 = scmp.ne.s32.totalorder %s190, %s204
      %p206 = scmp.eq.s32.totalorder %s33, 0
      %p207 = por %p205, %p206
      %s209 = sadd.s32 %s208, 1
      %p212 = scmp.eq.s32.totalorder %s27, 1
      %p213 = scmp.ne.s32.totalorder %s208, %s210
      %p214 = scmp.eq.s32.totalorder %s27, 0
      %p215 = por %p213, %p214
      %p216 = scmp.ne.s32.totalorder %s208, %s210
      %p217 = scmp.eq.s32.totalorder %s32, 1
      %p218 = por %p216, %p217
      %p219 = scmp.ne.s32.totalorder %s210, %s211
      %p220 = scmp.eq.s32.totalorder %s32, 0
      %p221 = por %p219, %p220
      %p222 = scmp.ne.s32.totalorder %s210, %s211
      %p223 = scmp.eq.s32.totalorder %s33, 1
      %p224 = por %p222, %p223
      %p226 = scmp.ne.s32.totalorder %s211, %s225
      %p227 = scmp.eq.s32.totalorder %s33, 0
      %p228 = por %p226, %p227
      %s230 = sadd.s32 %s229, 1
      %p233 = scmp.eq.s32.totalorder %s27, 1
      %p234 = scmp.ne.s32.totalorder %s229, %s231
      %p235 = scmp.eq.s32.totalorder %s27, 0
      %p236 = por %p234, %p235
      %p237 = scmp.ne.s32.totalorder %s229, %s231
      %p238 = scmp.eq.s32.totalorder %s32, 1
      %p239 = por %p237, %p238
      %p240 = scmp.ne.s32.totalorder %s231, %s232
      %p241 = scmp.eq.s32.totalorder %s32, 0
      %p242 = por %p240, %p241
      %p243 = scmp.ne.s32.totalorder %s231, %s232
      %p244 = scmp.eq.s32.totalorder %s33, 1
      %p245 = por %p243, %p244
      %p247 = scmp.ne.s32.totalorder %s232, %s246
      %p248 = scmp.eq.s32.totalorder %s33, 0
      %p249 = por %p247, %p248
      %s251 = sadd.s32 %s250, 1
      %p254 = scmp.eq.s32.totalorder %s27, 1
      %p255 = scmp.ne.s32.totalorder %s250, %s252
      %p256 = scmp.eq.s32.totalorder %s27, 0
      %p257 = por %p255, %p256
      %p258 = scmp.ne.s32.totalorder %s250, %s252
      %p259 = scmp.eq.s32.totalorder %s32, 1
      %p260 = por %p258, %p259
      %p261 = scmp.ne.s32.totalorder %s252, %s253
      %p262 = scmp.eq.s32.totalorder %s32, 0
      %p263 = por %p261, %p262
      %p264 = scmp.ne.s32.totalorder %s252, %s253
      %p265 = scmp.eq.s32.totalorder %s33, 1
      %p266 = por %p264, %p265
      %p268 = scmp.ne.s32.totalorder %s253, %s267
      %p269 = scmp.eq.s32.totalorder %s33, 0
      %p270 = por %p268, %p269
      %s272 = sadd.s32 %s271, 1
      %p275 = scmp.eq.s32.totalorder %s27, 1
      %p276 = scmp.ne.s32.totalorder %s271, %s273
      %p277 = scmp.eq.s32.totalorder %s27, 0
      %p278 = por %p276, %p277
      %p279 = scmp.ne.s32.totalorder %s271, %s273
      %p280 = scmp.eq.s32.totalorder %s32, 1
      %p281 = por %p279, %p280
      %p282 = scmp.ne.s32.totalorder %s273, %s274
      %p283 = scmp.eq.s32.totalorder %s32, 0
      %p284 = por %p282, %p283
      %p285 = scmp.ne.s32.totalorder %s273, %s274
      %p286 = scmp.eq.s32.totalorder %s33, 1
      %p287 = por %p285, %p286
      %p289 = scmp.ne.s32.totalorder %s274, %s288
      %p290 = scmp.eq.s32.totalorder %s33, 0
      %p291 = por %p289, %p290
      %s293 = sadd.s32 %s292, 1
      %p296 = scmp.eq.s32.totalorder %s27, 1
      %p297 = scmp.ne.s32.totalorder %s292, %s294
      %p298 = scmp.eq.s32.totalorder %s27, 0
      %p299 = por %p297, %p298
      %p300 = scmp.ne.s32.totalorder %s292, %s294
      %p301 = scmp.eq.s32.totalorder %s32, 1
      %p302 = por %p300, %p301
      %p303 = scmp.ne.s32.totalorder %s294, %s295
      %p304 = scmp.eq.s32.totalorder %s32, 0
      %p305 = por %p303, %p304
      %p306 = scmp.ne.s32.totalorder %s294, %s295
      %p307 = scmp.eq.s32.totalorder %s33, 1
      %p308 = por %p306, %p307
      %p310 = scmp.ne.s32.totalorder %s295, %s309
      %p311 = scmp.eq.s32.totalorder %s33, 0
      %p312 = por %p310, %p311
      %s313 = ssub.s32 %s27, %s34
      %p314 = scmp.eq.s32.totalorder %s313, 0
      %s316 = sadd.s32 %s315, 1
      %s317 = scalar_select %p314, %s315, %s316
      %p320 = pneg %p314
      %p321 = scmp.eq.s32.totalorder %s27, 1
      %p322 = por %p320, %p321
      %p323 = scmp.ne.s32.totalorder %s315, %s318
      %p324 = scmp.eq.s32.totalorder %s27, 0
      %p325 = por %p323, %p324
      %p326 = scmp.ne.s32.totalorder %s315, %s318
      %p327 = scmp.eq.s32.totalorder %s32, 1
      %p328 = por %p326, %p327
      %p329 = scmp.ne.s32.totalorder %s318, %s319
      %p330 = scmp.eq.s32.totalorder %s32, 0
      %p331 = por %p329, %p330
      %p332 = scmp.ne.s32.totalorder %s318, %s319
      %p333 = scmp.eq.s32.totalorder %s33, 1
      %p334 = por %p332, %p333
      %p336 = scmp.ne.s32.totalorder %s319, %s335
      %p337 = scmp.eq.s32.totalorder %s33, 0
      %p338 = por %p336, %p337
      %s339 = ssub.s32 %s27, %s34
      %p340 = scmp.eq.s32.totalorder %s339, 0
      %s342 = sadd.s32 %s341, 1
      %s343 = scalar_select %p340, %s341, %s342
      %p346 = pneg %p340
      %p347 = scmp.eq.s32.totalorder %s27, 1
      %p348 = por %p346, %p347
      %p349 = scmp.ne.s32.totalorder %s341, %s344
      %p350 = scmp.eq.s32.totalorder %s27, 0
      %p351 = por %p349, %p350
      %p352 = scmp.ne.s32.totalorder %s341, %s344
      %p353 = scmp.eq.s32.totalorder %s32, 1
      %p354 = por %p352, %p353
      %p355 = scmp.ne.s32.totalorder %s344, %s345
      %p356 = scmp.eq.s32.totalorder %s32, 0
      %p357 = por %p355, %p356
      %p358 = scmp.ne.s32.totalorder %s344, %s345
      %p359 = scmp.eq.s32.totalorder %s33, 1
      %p360 = por %p358, %p359
      %p362 = scmp.ne.s32.totalorder %s345, %s361
      %p363 = scmp.eq.s32.totalorder %s33, 0
      %p364 = por %p362, %p363
      %p365 = scmp.le.s32.totalorder 1, %s27
      %p366 = scmp.lt.s32.totalorder %s27, 3
      %p367 = pnand %p365, %p366
      %p368 = pneg %p367
      // Predicated region
      $region9: #{tpu_custom_call.1} parent=5 // pred_check
        _
      $region10: #{tpu_custom_call.1} parent=5 // pred_check_branch
        %370 = sbr.rel (%p367) target = $region12
      $region11: #{tpu_custom_call.1} parent=5 // pred_region
        %s371 = ssub.s32 %s27, 1
        // Predicated region
        $region13: #{tpu_custom_call.1} parent=11 // pred_check
          %p372 = pneg %p74
        $region14: #{tpu_custom_call.1} parent=11 // pred_check_branch
          %374 = sbr.rel (%p372) target = $region16
        $region15: #{tpu_custom_call.1} parent=11 // pred_region
          _
        $region16: #{tpu_custom_call.1} parent=11 // pred_fallthru
          _
        // Predicated region
        $region17: #{tpu_custom_call.1} parent=11 // pred_check
          %p375 = pneg %p95
        $region18: #{tpu_custom_call.1} parent=11 // pred_check_branch
          %377 = sbr.rel (%p375) target = $region20
        $region19: #{tpu_custom_call.1} parent=11 // pred_region
          _
        $region20: #{tpu_custom_call.1} parent=11 // pred_fallthru
          _
        // Predicated region
        $region21: #{tpu_custom_call.1} parent=11 // pred_check
          %p378 = pneg %p116
        $region22: #{tpu_custom_call.1} parent=11 // pred_check_branch
          %380 = sbr.rel (%p378) target = $region24
        $region23: #{tpu_custom_call.1} parent=11 // pred_region
          _
        $region24: #{tpu_custom_call.1} parent=11 // pred_fallthru
          _
        // Predicated region
        $region25: #{tpu_custom_call.1} parent=11 // pred_check
          %p381 = pneg %p137
        $region26: #{tpu_custom_call.1} parent=11 // pred_check_branch
          %383 = sbr.rel (%p381) target = $region28
        $region27: #{tpu_custom_call.1} parent=11 // pred_region
          _
        $region28: #{tpu_custom_call.1} parent=11 // pred_fallthru
          _
        // Predicated region
        $region29: #{tpu_custom_call.1} parent=11 // pred_check
          %p384 = pneg %p158
        $region30: #{tpu_custom_call.1} parent=11 // pred_check_branch
          %386 = sbr.rel (%p384) target = $region32
        $region31: #{tpu_custom_call.1} parent=11 // pred_region
          _
        $region32: #{tpu_custom_call.1} parent=11 // pred_fallthru
          _
        // Predicated region
        $region33: #{tpu_custom_call.1} parent=11 // pred_check
          %p387 = pneg %p179
        $region34: #{tpu_custom_call.1} parent=11 // pred_check_branch
          %389 = sbr.rel (%p387) target = $region36
        $region35: #{tpu_custom_call.1} parent=11 // pred_region
          _
        $region36: #{tpu_custom_call.1} parent=11 // pred_fallthru
          _
        // Predicated region
        $region37: #{tpu_custom_call.1} parent=11 // pred_check
          %p390 = pneg %p200
        $region38: #{tpu_custom_call.1} parent=11 // pred_check_branch
          %392 = sbr.rel (%p390) target = $region40
        $region39: #{tpu_custom_call.1} parent=11 // pred_region
          _
        $region40: #{tpu_custom_call.1} parent=11 // pred_fallthru
          _
        // Predicated region
        $region41: #{tpu_custom_call.1} parent=11 // pred_check
          %p393 = pneg %p221
        $region42: #{tpu_custom_call.1} parent=11 // pred_check_branch
          %395 = sbr.rel (%p393) target = $region44
        $region43: #{tpu_custom_call.1} parent=11 // pred_region
          _
        $region44: #{tpu_custom_call.1} parent=11 // pred_fallthru
          _
        // Predicated region
        $region45: #{tpu_custom_call.1} parent=11 // pred_check
          %p396 = pneg %p242
        $region46: #{tpu_custom_call.1} parent=11 // pred_check_branch
          %398 = sbr.rel (%p396) target = $region48
        $region47: #{tpu_custom_call.1} parent=11 // pred_region
          _
        $region48: #{tpu_custom_call.1} parent=11 // pred_fallthru
          _
        // Predicated region
        $region49: #{tpu_custom_call.1} parent=11 // pred_check
          %p399 = pneg %p263
        $region50: #{tpu_custom_call.1} parent=11 // pred_check_branch
          %401 = sbr.rel (%p399) target = $region52
        $region51: #{tpu_custom_call.1} parent=11 // pred_region
          _
        $region52: #{tpu_custom_call.1} parent=11 // pred_fallthru
          _
        // Predicated region
        $region53: #{tpu_custom_call.1} parent=11 // pred_check
          %p402 = pneg %p284
        $region54: #{tpu_custom_call.1} parent=11 // pred_check_branch
          %404 = sbr.rel (%p402) target = $region56
        $region55: #{tpu_custom_call.1} parent=11 // pred_region
          _
        $region56: #{tpu_custom_call.1} parent=11 // pred_fallthru
          _
        // Predicated region
        $region57: #{tpu_custom_call.1} parent=11 // pred_check
          %p405 = pneg %p305
        $region58: #{tpu_custom_call.1} parent=11 // pred_check_branch
          %407 = sbr.rel (%p405) target = $region60
        $region59: #{tpu_custom_call.1} parent=11 // pred_region
          _
        $region60: #{tpu_custom_call.1} parent=11 // pred_fallthru
          _
      $region12: #{tpu_custom_call.1} parent=5 // pred_fallthru
        _
      %p408 = scmp.lt.s32.totalorder %s27, 2
      // Predicated region
      $region61: #{tpu_custom_call.1} parent=5 // pred_check
        %p409 = pneg %p408
      $region62: #{tpu_custom_call.1} parent=5 // pred_check_branch
        %411 = sbr.rel (%p409) target = $region64
      $region63: #{tpu_custom_call.1} parent=5 // pred_region
        // Predicated region
        $region65: #{tpu_custom_call.1} parent=63 // pred_check
          %p412 = pneg %p47
        $region66: #{tpu_custom_call.1} parent=63 // pred_check_branch
          %414 = sbr.rel (%p412) target = $region68
        $region67: #{tpu_custom_call.1} parent=63 // pred_region
          %s415 = sand.u32 %s37, 1
          %s416 = sand.u32 %s37, 1
          %s417 = smul.addr %s416, 128
          %s418 = scalar_lea.vmem [#allocation2], %s417
          %s419 = smul.u32 4, %s27
          %s420 = smul.addr %s419, 8
          %s421 = scalar_lea.vmem %s0, %s420
          // Predicated region
          $region69: #{tpu_custom_call.1} parent=67 // pred_check
            _
          $region70: #{tpu_custom_call.1} parent=67 // pred_check_branch
            %423 = sbr.rel (0) target = $region72
          $region71: #{tpu_custom_call.1} parent=67 // pred_region
            // Predicated region
            $region73: #{tpu_custom_call.1} parent=71 // pred_check
              _
            $region74: #{tpu_custom_call.1} parent=71 // pred_check_branch
              %425 = sbr.rel (0) target = $region76
            $region75: #{tpu_custom_call.1} parent=71 // pred_region
              loop: start=0, step=1, limit=1
              $region77: #{tpu_custom_call.1} parent=75 // loop_pre_header
                _
              $region78: #{tpu_custom_call.1} parent=75 // loop_header
                %s427 = sphi 0, %s431
                %p428 = scmp.ge.s32.totalorder %s427, 1
                %s432 = sphi %s421, %s421
                %s433 = sphi %s418, %s418
              $region79: #{tpu_custom_call.1} parent=75 // loop_header_branch
                %430 = sbr.rel (%p428) target = $region83
              $region80: #{tpu_custom_call.1} parent=75 // loop_body
                %v434 = vld [vmem:[%s432] sm:$0xff]
                %435 = vst [vmem:[%s433] sm:$0xff] %v434
                %v436 = vld [vmem:[%s432 + $0x8] sm:$0xff]
                %437 = vst [vmem:[%s433 + $0x8] sm:$0xff] %v436
                %v438 = vld [vmem:[%s432 + $0x10] sm:$0xff]
                %439 = vst [vmem:[%s433 + $0x10] sm:$0xff] %v438
                %v440 = vld [vmem:[%s432 + $0x18] sm:$0xff]
                %441 = vst [vmem:[%s433 + $0x18] sm:$0xff] %v440
                %v442 = vld [vmem:[%s432 + $0x40] sm:$0xff]
                %443 = vst [vmem:[%s433 + $0x20] sm:$0xff] %v442
                %v444 = vld [vmem:[%s432 + $0x48] sm:$0xff]
                %445 = vst [vmem:[%s433 + $0x28] sm:$0xff] %v444
                %v446 = vld [vmem:[%s432 + $0x50] sm:$0xff]
                %447 = vst [vmem:[%s433 + $0x30] sm:$0xff] %v446
                %v448 = vld [vmem:[%s432 + $0x58] sm:$0xff]
                %449 = vst [vmem:[%s433 + $0x38] sm:$0xff] %v448
                %v450 = vld [vmem:[%s432 + $0x80] sm:$0xff]
                %451 = vst [vmem:[%s433 + $0x40] sm:$0xff] %v450
                %v452 = vld [vmem:[%s432 + $0x88] sm:$0xff]
                %453 = vst [vmem:[%s433 + $0x48] sm:$0xff] %v452
                %v454 = vld [vmem:[%s432 + $0x90] sm:$0xff]
                %455 = vst [vmem:[%s433 + $0x50] sm:$0xff] %v454
                %v456 = vld [vmem:[%s432 + $0x98] sm:$0xff]
                %457 = vst [vmem:[%s433 + $0x58] sm:$0xff] %v456
                %v458 = vld [vmem:[%s432 + $0xc0] sm:$0xff]
                %459 = vst [vmem:[%s433 + $0x60] sm:$0xff] %v458
                %v460 = vld [vmem:[%s432 + $0xc8] sm:$0xff]
                %461 = vst [vmem:[%s433 + $0x68] sm:$0xff] %v460
                %v462 = vld [vmem:[%s432 + $0xd0] sm:$0xff]
                %463 = vst [vmem:[%s433 + $0x70] sm:$0xff] %v462
                %v464 = vld [vmem:[%s432 + $0xd8] sm:$0xff]
                %465 = vst [vmem:[%s433 + $0x78] sm:$0xff] %v464
              $region81: #{tpu_custom_call.1} parent=75 // loop_footer
                %s431 = sadd.s32 1, %s427
              $region82: #{tpu_custom_call.1} parent=75 // loop_footer_branch
                %426 = sbr.rel target = $region78
              $region83: #{tpu_custom_call.1} parent=75 // loop_exit
                _
            $region76: #{tpu_custom_call.1} parent=71 // pred_fallthru
              _
            // Predicated region
            $region84: #{tpu_custom_call.1} parent=71 // pred_check
              _
            $region85: #{tpu_custom_call.1} parent=71 // pred_check_branch
              %467 = sbr.rel target = $region87
            $region86: #{tpu_custom_call.1} parent=71 // pred_region
              _
            $region87: #{tpu_custom_call.1} parent=71 // pred_fallthru
              _
          $region72: #{tpu_custom_call.1} parent=67 // pred_fallthru
            _
          %468 = vnop
        $region68: #{tpu_custom_call.1} parent=63 // pred_fallthru
          _
      $region64: #{tpu_custom_call.1} parent=5 // pred_fallthru
        _
      %p469 = scmp.le.s32.totalorder 1, %s27
      %p470 = scmp.lt.s32.totalorder %s27, 3
      %p471 = pnand %p469, %p470
      %p472 = pneg %p471
      // Predicated region
      $region88: #{tpu_custom_call.1} parent=5 // pred_check
        _
      $region89: #{tpu_custom_call.1} parent=5 // pred_check_branch
        %474 = sbr.rel (%p471) target = $region91
      $region90: #{tpu_custom_call.1} parent=5 // pred_region
        %s475 = ssub.s32 %s27, 1
        %s476 = sand.u32 %s40, 1
        %s477 = sand.u32 %s40, 1
        %s478 = smul.addr %s477, 128
        %s479 = scalar_lea.vmem [#allocation2], %s478
        // Predicated region
        $region92: #{tpu_custom_call.1} parent=90 // pred_check
          %p480 = pneg %p53
        $region93: #{tpu_custom_call.1} parent=90 // pred_check_branch
          %482 = sbr.rel (%p480) target = $region95
        $region94: #{tpu_custom_call.1} parent=90 // pred_region
          _
        $region95: #{tpu_custom_call.1} parent=90 // pred_fallthru
          _
        %s483 = sand.u32 %s40, 1
        %s484 = sand.u32 %s40, 1
        %s485 = smul.addr %s484, 128
        %s486 = scalar_lea.vmem [#allocation2], %s485
        %p487 = pneg %p53
        %p488 = pneg %p50
        %p489 = pneg %p74
        %p490 = pneg %p71
        %p491 = pneg %p95
        %p492 = pneg %p92
        %p493 = pneg %p116
        %p494 = pneg %p113
        %p495 = pneg %p137
        %p496 = pneg %p134
        %p497 = pneg %p158
        %p498 = pneg %p155
        %p499 = pneg %p179
        %p500 = pneg %p176
        %p501 = pneg %p200
        %p502 = pneg %p197
        %p503 = pneg %p221
        %p504 = pneg %p218
        %p505 = pneg %p242
        %p506 = pneg %p239
        %p507 = pneg %p263
        %p508 = pneg %p260
        %p509 = pneg %p284
        %p510 = pneg %p281
        %p511 = pneg %p305
        %p512 = pneg %p302
        %p513 = pneg %p331
        %p514 = pneg %p328
        %s515 = sand.u32 %s318, 1
        %s516 = scalar_lea.sflag [#allocation4], %s515
        %s517 = sand.u32 %s318, 1
        %s518 = smul.addr %s517, 128
        %s519 = scalar_lea.vmem [#allocation3], %s518
        %p520 = pneg %p357
        %p521 = pneg %p354
        %s522 = sand.u32 %s344, 1
        %s523 = scalar_lea.sflag [#allocation6], %s522
        %s524 = sand.u32 %s344, 1
        %s525 = smul.addr %s524, 16
        %s526 = scalar_lea.vmem [#allocation5], %s525
        %s527 = smul.u32 4, %s32
        %s528 = smul.u32 4, %s32
        %s529 = smul.u32 4, %s32
        %v530 = vld [vmem:[%s479] sm:$0xff]
        %v531 = vld [vmem:[%s479 + $0x8] sm:$0xff]
        %v532 = vld [vmem:[%s479 + $0x10] sm:$0xff]
        %v533 = vld [vmem:[%s479 + $0x18] sm:$0xff]
        %v534 = vld [vmem:[%s479 + $0x20] sm:$0xff]
        %v535 = vld [vmem:[%s479 + $0x28] sm:$0xff]
        %v536 = vld [vmem:[%s479 + $0x30] sm:$0xff]
        %v537 = vld [vmem:[%s479 + $0x38] sm:$0xff]
        %v538 = vld [vmem:[%s479 + $0x40] sm:$0xff]
        %v539 = vld [vmem:[%s479 + $0x48] sm:$0xff]
        %v540 = vld [vmem:[%s479 + $0x50] sm:$0xff]
        %v541 = vld [vmem:[%s479 + $0x58] sm:$0xff]
        %v542 = vld [vmem:[%s479 + $0x60] sm:$0xff]
        %v543 = vld [vmem:[%s479 + $0x68] sm:$0xff]
        %v544 = vld [vmem:[%s479 + $0x70] sm:$0xff]
        %v545 = vld [vmem:[%s479 + $0x78] sm:$0xff]
        %v546 = vld [vmem:[%s1] sm:$0xff]
        %v547 = vld [vmem:[%s1 + $0x8] sm:$0xff]
        %v548 = vld [vmem:[%s1 + $0x10] sm:$0xff]
        %v549 = vld [vmem:[%s1 + $0x18] sm:$0xff]
        %v550 = vld [vmem:[%s1 + $0x20] sm:$0xff]
        %v551 = vld [vmem:[%s1 + $0x28] sm:$0xff]
        %v552 = vld [vmem:[%s1 + $0x30] sm:$0xff]
        %v553 = vld [vmem:[%s1 + $0x38] sm:$0xff]
        %v554 = vld [vmem:[%s1 + $0x40] sm:$0xff]
        %v555 = vld [vmem:[%s1 + $0x48] sm:$0xff]
        %v556 = vld [vmem:[%s1 + $0x50] sm:$0xff]
        %v557 = vld [vmem:[%s1 + $0x58] sm:$0xff]
        %v558 = vld [vmem:[%s1 + $0x60] sm:$0xff]
        %v559 = vld [vmem:[%s1 + $0x68] sm:$0xff]
        %v560 = vld [vmem:[%s1 + $0x70] sm:$0xff]
        %v561 = vld [vmem:[%s1 + $0x78] sm:$0xff]
        %v562 = vld [vmem:[%s2] sm:$0xff]
        %v563 = vld [vmem:[%s2 + $0x8] sm:$0xff]
        %v564 = vld [vmem:[%s2 + $0x10] sm:$0xff]
        %v565 = vld [vmem:[%s2 + $0x18] sm:$0xff]
        %v566 = vld [vmem:[%s2 + $0x20] sm:$0xff]
        %v567 = vld [vmem:[%s2 + $0x28] sm:$0xff]
        %v568 = vld [vmem:[%s2 + $0x30] sm:$0xff]
        %v569 = vld [vmem:[%s2 + $0x38] sm:$0xff]
        %v570 = vld [vmem:[%s2 + $0x40] sm:$0xff]
        %v571 = vld [vmem:[%s2 + $0x48] sm:$0xff]
        %v572 = vld [vmem:[%s2 + $0x50] sm:$0xff]
        %v573 = vld [vmem:[%s2 + $0x58] sm:$0xff]
        %v574 = vld [vmem:[%s2 + $0x60] sm:$0xff]
        %v575 = vld [vmem:[%s2 + $0x68] sm:$0xff]
        %v576 = vld [vmem:[%s2 + $0x70] sm:$0xff]
        %v577 = vld [vmem:[%s2 + $0x78] sm:$0xff]
        %579 = vset.pattern.permute.xlu0 0
        %580 = vperm.xlu0 %579, %v562
        %v581 = vpop.permute.xlu0 %580
        %584 = vset.pattern.permute.xlu0 0
        %585 = vperm.xlu0 %584, %v563
        %v586 = vpop.permute.xlu0 %585
        %589 = vset.pattern.permute.xlu0 0
        %590 = vperm.xlu0 %589, %v564
        %v591 = vpop.permute.xlu0 %590
        %594 = vset.pattern.permute.xlu0 0
        %595 = vperm.xlu0 %594, %v565
        %v596 = vpop.permute.xlu0 %595
        %599 = vset.pattern.permute.xlu0 0
        %600 = vperm.xlu0 %599, %v566
        %v601 = vpop.permute.xlu0 %600
        %604 = vset.pattern.permute.xlu0 0
        %605 = vperm.xlu0 %604, %v567
        %v606 = vpop.permute.xlu0 %605
        %609 = vset.pattern.permute.xlu0 0
        %610 = vperm.xlu0 %609, %v568
        %v611 = vpop.permute.xlu0 %610
        %614 = vset.pattern.permute.xlu0 0
        %615 = vperm.xlu0 %614, %v569
        %v616 = vpop.permute.xlu0 %615
        %619 = vset.pattern.permute.xlu0 0
        %620 = vperm.xlu0 %619, %v570
        %v621 = vpop.permute.xlu0 %620
        %624 = vset.pattern.permute.xlu0 0
        %625 = vperm.xlu0 %624, %v571
        %v626 = vpop.permute.xlu0 %625
        %629 = vset.pattern.permute.xlu0 0
        %630 = vperm.xlu0 %629, %v572
        %v631 = vpop.permute.xlu0 %630
        %634 = vset.pattern.permute.xlu0 0
        %635 = vperm.xlu0 %634, %v573
        %v636 = vpop.permute.xlu0 %635
        %639 = vset.pattern.permute.xlu0 0
        %640 = vperm.xlu0 %639, %v574
        %v641 = vpop.permute.xlu0 %640
        %644 = vset.pattern.permute.xlu0 0
        %645 = vperm.xlu0 %644, %v575
        %v646 = vpop.permute.xlu0 %645
        %649 = vset.pattern.permute.xlu0 0
        %650 = vperm.xlu0 %649, %v576
        %v651 = vpop.permute.xlu0 %650
        %654 = vset.pattern.permute.xlu0 0
        %655 = vperm.xlu0 %654, %v577
        %v656 = vpop.permute.xlu0 %655
        %vm658 = vcmask 261120
        %v660 = vsel %vm658, %v546, 0
        %v663 = vsel %vm658, %v547, 0
        %v666 = vsel %vm658, %v548, 0
        %v669 = vsel %vm658, %v549, 0
        %v672 = vsel %vm658, %v550, 0
        %v675 = vsel %vm658, %v551, 0
        %v678 = vsel %vm658, %v552, 0
        %v681 = vsel %vm658, %v553, 0
        %v684 = vsel %vm658, %v554, 0
        %v687 = vsel %vm658, %v555, 0
        %v690 = vsel %vm658, %v556, 0
        %v693 = vsel %vm658, %v557, 0
        %v696 = vsel %vm658, %v558, 0
        %v699 = vsel %vm658, %v559, 0
        %v702 = vsel %vm658, %v560, 0
        %v705 = vsel %vm658, %v561, 0
        %707 = vmatpush.msra.mxu0 0.0
        %708 = vmatpush.msra.mxu0 0.0
        %709 = vmatpush.msra.mxu0 0.0
        %710 = vmatpush.msra.mxu0 0.0
        %711 = vmatpush.msra.mxu0 0.0
        %712 = vmatpush.msra.mxu0 0.0
        %713 = vmatpush.msra.mxu0 0.0
        %714 = vmatpush.msra.mxu0 0.0
        %715 = vmatpush.msra.mxu0 0.0
        %716 = vmatpush.msra.mxu0 0.0
        %717 = vmatpush.msra.mxu0 0.0
        %718 = vmatpush.msra.mxu0 0.0
        %719 = vmatpush.msra.mxu0 %v542
        %720 = vmatpush.msra.mxu0 %v538
        %721 = vmatpush.msra.mxu0 %v534
        %722 = vmatpush.msra.mxu0 %v530
        %723 = vmatmul.f32.gmra.mxu0 %v660
        %v724 = vpop.f32.mrf.mxu0
        %v725 = vadd.f32 %v581, %v724
        %726 = vmatmul.f32.gmra.mxu0 %v663
        %v727 = vpop.f32.mrf.mxu0
        %v728 = vadd.f32 %v586, %v727
        %729 = vmatmul.f32.gmra.mxu0 %v666
        %v730 = vpop.f32.mrf.mxu0
        %v731 = vadd.f32 %v591, %v730
        %732 = vmatmul.f32.gmra.mxu0 %v669
        %v733 = vpop.f32.mrf.mxu0
        %v734 = vadd.f32 %v596, %v733
        %735 = vmatmul.f32.gmra.mxu0 %v672
        %v736 = vpop.f32.mrf.mxu0
        %v737 = vadd.f32 %v601, %v736
        %738 = vmatmul.f32.gmra.mxu0 %v675
        %v739 = vpop.f32.mrf.mxu0
        %v740 = vadd.f32 %v606, %v739
        %741 = vmatmul.f32.gmra.mxu0 %v678
        %v742 = vpop.f32.mrf.mxu0
        %v743 = vadd.f32 %v611, %v742
        %744 = vmatmul.f32.gmra.mxu0 %v681
        %v745 = vpop.f32.mrf.mxu0
        %v746 = vadd.f32 %v616, %v745
        %747 = vmatmul.f32.gmra.mxu0 %v684
        %v748 = vpop.f32.mrf.mxu0
        %v749 = vadd.f32 %v621, %v748
        %750 = vmatmul.f32.gmra.mxu0 %v687
        %v751 = vpop.f32.mrf.mxu0
        %v752 = vadd.f32 %v626, %v751
        %753 = vmatmul.f32.gmra.mxu0 %v690
        %v754 = vpop.f32.mrf.mxu0
        %v755 = vadd.f32 %v631, %v754
        %756 = vmatmul.f32.gmra.mxu0 %v693
        %v757 = vpop.f32.mrf.mxu0
        %v758 = vadd.f32 %v636, %v757
        %759 = vmatmul.f32.gmra.mxu0 %v696
        %v760 = vpop.f32.mrf.mxu0
        %v761 = vadd.f32 %v641, %v760
        %762 = vmatmul.f32.gmra.mxu0 %v699
        %v763 = vpop.f32.mrf.mxu0
        %v764 = vadd.f32 %v646, %v763
        %765 = vmatmul.f32.gmra.mxu0 %v702
        %v766 = vpop.f32.mrf.mxu0
        %v767 = vadd.f32 %v651, %v766
        %768 = vmatmul.f32.gmra.mxu0 %v705
        %v769 = vpop.f32.mrf.mxu0
        %v770 = vadd.f32 %v656, %v769
        %771 = vdwg.mxu0
        %772 = vmatpush.msra.mxu0 0.0
        %773 = vmatpush.msra.mxu0 0.0
        %774 = vmatpush.msra.mxu0 0.0
        %775 = vmatpush.msra.mxu0 0.0
        %776 = vmatpush.msra.mxu0 0.0
        %777 = vmatpush.msra.mxu0 0.0
        %778 = vmatpush.msra.mxu0 0.0
        %779 = vmatpush.msra.mxu0 0.0
        %780 = vmatpush.msra.mxu0 0.0
        %781 = vmatpush.msra.mxu0 0.0
        %782 = vmatpush.msra.mxu0 0.0
        %783 = vmatpush.msra.mxu0 0.0
        %784 = vmatpush.msra.mxu0 %v543
        %785 = vmatpush.msra.mxu0 %v539
        %786 = vmatpush.msra.mxu0 %v535
        %787 = vmatpush.msra.mxu0 %v531
        %788 = vmatmul.f32.gmra.mxu0 %v660
        %v789 = vpop.f32.mrf.mxu0
        %v790 = vadd.f32 %v581, %v789
        %791 = vmatmul.f32.gmra.mxu0 %v663
        %v792 = vpop.f32.mrf.mxu0
        %v793 = vadd.f32 %v586, %v792
        %794 = vmatmul.f32.gmra.mxu0 %v666
        %v795 = vpop.f32.mrf.mxu0
        %v796 = vadd.f32 %v591, %v795
        %797 = vmatmul.f32.gmra.mxu0 %v669
        %v798 = vpop.f32.mrf.mxu0
        %v799 = vadd.f32 %v596, %v798
        %800 = vmatmul.f32.gmra.mxu0 %v672
        %v801 = vpop.f32.mrf.mxu0
        %v802 = vadd.f32 %v601, %v801
        %803 = vmatmul.f32.gmra.mxu0 %v675
        %v804 = vpop.f32.mrf.mxu0
        %v805 = vadd.f32 %v606, %v804
        %806 = vmatmul.f32.gmra.mxu0 %v678
        %v807 = vpop.f32.mrf.mxu0
        %v808 = vadd.f32 %v611, %v807
        %809 = vmatmul.f32.gmra.mxu0 %v681
        %v810 = vpop.f32.mrf.mxu0
        %v811 = vadd.f32 %v616, %v810
        %812 = vmatmul.f32.gmra.mxu0 %v684
        %v813 = vpop.f32.mrf.mxu0
        %v814 = vadd.f32 %v621, %v813
        %815 = vmatmul.f32.gmra.mxu0 %v687
        %v816 = vpop.f32.mrf.mxu0
        %v817 = vadd.f32 %v626, %v816
        %818 = vmatmul.f32.gmra.mxu0 %v690
        %v819 = vpop.f32.mrf.mxu0
        %v820 = vadd.f32 %v631, %v819
        %821 = vmatmul.f32.gmra.mxu0 %v693
        %v822 = vpop.f32.mrf.mxu0
        %v823 = vadd.f32 %v636, %v822
        %824 = vmatmul.f32.gmra.mxu0 %v696
        %v825 = vpop.f32.mrf.mxu0
        %v826 = vadd.f32 %v641, %v825
        %827 = vmatmul.f32.gmra.mxu0 %v699
        %v828 = vpop.f32.mrf.mxu0
        %v829 = vadd.f32 %v646, %v828
        %830 = vmatmul.f32.gmra.mxu0 %v702
        %v831 = vpop.f32.mrf.mxu0
        %v832 = vadd.f32 %v651, %v831
        %833 = vmatmul.f32.gmra.mxu0 %v705
        %v834 = vpop.f32.mrf.mxu0
        %v835 = vadd.f32 %v656, %v834
        %836 = vdwg.mxu0
        %837 = vmatpush.msra.mxu0 0.0
        %838 = vmatpush.msra.mxu0 0.0
        %839 = vmatpush.msra.mxu0 0.0
        %840 = vmatpush.msra.mxu0 0.0
        %841 = vmatpush.msra.mxu0 0.0
        %842 = vmatpush.msra.mxu0 0.0
        %843 = vmatpush.msra.mxu0 0.0
        %844 = vmatpush.msra.mxu0 0.0
        %845 = vmatpush.msra.mxu0 0.0
        %846 = vmatpush.msra.mxu0 0.0
        %847 = vmatpush.msra.mxu0 0.0
        %848 = vmatpush.msra.mxu0 0.0
        %849 = vmatpush.msra.mxu0 %v544
        %850 = vmatpush.msra.mxu0 %v540
        %851 = vmatpush.msra.mxu0 %v536
        %852 = vmatpush.msra.mxu0 %v532
        %853 = vmatmul.f32.gmra.mxu0 %v660
        %v854 = vpop.f32.mrf.mxu0
        %v855 = vadd.f32 %v581, %v854
        %856 = vmatmul.f32.gmra.mxu0 %v663
        %v857 = vpop.f32.mrf.mxu0
        %v858 = vadd.f32 %v586, %v857
        %859 = vmatmul.f32.gmra.mxu0 %v666
        %v860 = vpop.f32.mrf.mxu0
        %v861 = vadd.f32 %v591, %v860
        %862 = vmatmul.f32.gmra.mxu0 %v669
        %v863 = vpop.f32.mrf.mxu0
        %v864 = vadd.f32 %v596, %v863
        %865 = vmatmul.f32.gmra.mxu0 %v672
        %v866 = vpop.f32.mrf.mxu0
        %v867 = vadd.f32 %v601, %v866
        %868 = vmatmul.f32.gmra.mxu0 %v675
        %v869 = vpop.f32.mrf.mxu0
        %v870 = vadd.f32 %v606, %v869
        %871 = vmatmul.f32.gmra.mxu0 %v678
        %v872 = vpop.f32.mrf.mxu0
        %v873 = vadd.f32 %v611, %v872
        %874 = vmatmul.f32.gmra.mxu0 %v681
        %v875 = vpop.f32.mrf.mxu0
        %v876 = vadd.f32 %v616, %v875
        %877 = vmatmul.f32.gmra.mxu0 %v684
        %v878 = vpop.f32.mrf.mxu0
        %v879 = vadd.f32 %v621, %v878
        %880 = vmatmul.f32.gmra.mxu0 %v687
        %v881 = vpop.f32.mrf.mxu0
        %v882 = vadd.f32 %v626, %v881
        %883 = vmatmul.f32.gmra.mxu0 %v690
        %v884 = vpop.f32.mrf.mxu0
        %v885 = vadd.f32 %v631, %v884
        %886 = vmatmul.f32.gmra.mxu0 %v693
        %v887 = vpop.f32.mrf.mxu0
        %v888 = vadd.f32 %v636, %v887
        %889 = vmatmul.f32.gmra.mxu0 %v696
        %v890 = vpop.f32.mrf.mxu0
        %v891 = vadd.f32 %v641, %v890
        %892 = vmatmul.f32.gmra.mxu0 %v699
        %v893 = vpop.f32.mrf.mxu0
        %v894 = vadd.f32 %v646, %v893
        %895 = vmatmul.f32.gmra.mxu0 %v702
        %v896 = vpop.f32.mrf.mxu0
        %v897 = vadd.f32 %v651, %v896
        %898 = vmatmul.f32.gmra.mxu0 %v705
        %v899 = vpop.f32.mrf.mxu0
        %v900 = vadd.f32 %v656, %v899
        %901 = vdwg.mxu0
        %902 = vmatpush.msra.mxu0 0.0
        %903 = vmatpush.msra.mxu0 0.0
        %904 = vmatpush.msra.mxu0 0.0
        %905 = vmatpush.msra.mxu0 0.0
        %906 = vmatpush.msra.mxu0 0.0
        %907 = vmatpush.msra.mxu0 0.0
        %908 = vmatpush.msra.mxu0 0.0
        %909 = vmatpush.msra.mxu0 0.0
        %910 = vmatpush.msra.mxu0 0.0
        %911 = vmatpush.msra.mxu0 0.0
        %912 = vmatpush.msra.mxu0 0.0
        %913 = vmatpush.msra.mxu0 0.0
        %914 = vmatpush.msra.mxu0 %v545
        %915 = vmatpush.msra.mxu0 %v541
        %916 = vmatpush.msra.mxu0 %v537
        %917 = vmatpush.msra.mxu0 %v533
        %918 = vmatmul.f32.gmra.mxu0 %v660
        %v919 = vpop.f32.mrf.mxu0
        %v920 = vadd.f32 %v581, %v919
        %921 = vmatmul.f32.gmra.mxu0 %v663
        %v922 = vpop.f32.mrf.mxu0
        %v923 = vadd.f32 %v586, %v922
        %924 = vmatmul.f32.gmra.mxu0 %v666
        %v925 = vpop.f32.mrf.mxu0
        %v926 = vadd.f32 %v591, %v925
        %927 = vmatmul.f32.gmra.mxu0 %v669
        %v928 = vpop.f32.mrf.mxu0
        %v929 = vadd.f32 %v596, %v928
        %930 = vmatmul.f32.gmra.mxu0 %v672
        %v931 = vpop.f32.mrf.mxu0
        %v932 = vadd.f32 %v601, %v931
        %933 = vmatmul.f32.gmra.mxu0 %v675
        %v934 = vpop.f32.mrf.mxu0
        %v935 = vadd.f32 %v606, %v934
        %936 = vmatmul.f32.gmra.mxu0 %v678
        %v937 = vpop.f32.mrf.mxu0
        %v938 = vadd.f32 %v611, %v937
        %939 = vmatmul.f32.gmra.mxu0 %v681
        %v940 = vpop.f32.mrf.mxu0
        %v941 = vadd.f32 %v616, %v940
        %942 = vmatmul.f32.gmra.mxu0 %v684
        %v943 = vpop.f32.mrf.mxu0
        %v944 = vadd.f32 %v621, %v943
        %945 = vmatmul.f32.gmra.mxu0 %v687
        %v946 = vpop.f32.mrf.mxu0
        %v947 = vadd.f32 %v626, %v946
        %948 = vmatmul.f32.gmra.mxu0 %v690
        %v949 = vpop.f32.mrf.mxu0
        %v950 = vadd.f32 %v631, %v949
        %951 = vmatmul.f32.gmra.mxu0 %v693
        %v952 = vpop.f32.mrf.mxu0
        %v953 = vadd.f32 %v636, %v952
        %954 = vmatmul.f32.gmra.mxu0 %v696
        %v955 = vpop.f32.mrf.mxu0
        %v956 = vadd.f32 %v641, %v955
        %957 = vmatmul.f32.gmra.mxu0 %v699
        %v958 = vpop.f32.mrf.mxu0
        %v959 = vadd.f32 %v646, %v958
        %960 = vmatmul.f32.gmra.mxu0 %v702
        %v961 = vpop.f32.mrf.mxu0
        %v962 = vadd.f32 %v651, %v961
        %963 = vmatmul.f32.gmra.mxu0 %v705
        %v964 = vpop.f32.mrf.mxu0
        %v965 = vadd.f32 %v656, %v964
        %966 = vdwg.mxu0
        %vm967 = vcmp.gt.f32.partialorder %v725, 0.0
        %vm968 = vcmp.gt.f32.partialorder %v790, 0.0
        %vm969 = vcmp.gt.f32.partialorder %v855, 0.0
        %vm970 = vcmp.gt.f32.partialorder %v920, 0.0
        %vm971 = vcmp.gt.f32.partialorder %v728, 0.0
        %vm972 = vcmp.gt.f32.partialorder %v793, 0.0
        %vm973 = vcmp.gt.f32.partialorder %v858, 0.0
        %vm974 = vcmp.gt.f32.partialorder %v923, 0.0
        %vm975 = vcmp.gt.f32.partialorder %v731, 0.0
        %vm976 = vcmp.gt.f32.partialorder %v796, 0.0
        %vm977 = vcmp.gt.f32.partialorder %v861, 0.0
        %vm978 = vcmp.gt.f32.partialorder %v926, 0.0
        %vm979 = vcmp.gt.f32.partialorder %v734, 0.0
        %vm980 = vcmp.gt.f32.partialorder %v799, 0.0
        %vm981 = vcmp.gt.f32.partialorder %v864, 0.0
        %vm982 = vcmp.gt.f32.partialorder %v929, 0.0
        %vm983 = vcmp.gt.f32.partialorder %v737, 0.0
        %vm984 = vcmp.gt.f32.partialorder %v802, 0.0
        %vm985 = vcmp.gt.f32.partialorder %v867, 0.0
        %vm986 = vcmp.gt.f32.partialorder %v932, 0.0
        %vm987 = vcmp.gt.f32.partialorder %v740, 0.0
        %vm988 = vcmp.gt.f32.partialorder %v805, 0.0
        %vm989 = vcmp.gt.f32.partialorder %v870, 0.0
        %vm990 = vcmp.gt.f32.partialorder %v935, 0.0
        %vm991 = vcmp.gt.f32.partialorder %v743, 0.0
        %vm992 = vcmp.gt.f32.partialorder %v808, 0.0
        %vm993 = vcmp.gt.f32.partialorder %v873, 0.0
        %vm994 = vcmp.gt.f32.partialorder %v938, 0.0
        %vm995 = vcmp.gt.f32.partialorder %v746, 0.0
        %vm996 = vcmp.gt.f32.partialorder %v811, 0.0
        %vm997 = vcmp.gt.f32.partialorder %v876, 0.0
        %vm998 = vcmp.gt.f32.partialorder %v941, 0.0
        %vm999 = vcmp.gt.f32.partialorder %v749, 0.0
        %vm1000 = vcmp.gt.f32.partialorder %v814, 0.0
        %vm1001 = vcmp.gt.f32.partialorder %v879, 0.0
        %vm1002 = vcmp.gt.f32.partialorder %v944, 0.0
        %vm1003 = vcmp.gt.f32.partialorder %v752, 0.0
        %vm1004 = vcmp.gt.f32.partialorder %v817, 0.0
        %vm1005 = vcmp.gt.f32.partialorder %v882, 0.0
        %vm1006 = vcmp.gt.f32.partialorder %v947, 0.0
        %vm1007 = vcmp.gt.f32.partialorder %v755, 0.0
        %vm1008 = vcmp.gt.f32.partialorder %v820, 0.0
        %vm1009 = vcmp.gt.f32.partialorder %v885, 0.0
        %vm1010 = vcmp.gt.f32.partialorder %v950, 0.0
        %vm1011 = vcmp.gt.f32.partialorder %v758, 0.0
        %vm1012 = vcmp.gt.f32.partialorder %v823, 0.0
        %vm1013 = vcmp.gt.f32.partialorder %v888, 0.0
        %vm1014 = vcmp.gt.f32.partialorder %v953, 0.0
        %vm1015 = vcmp.gt.f32.partialorder %v761, 0.0
        %vm1016 = vcmp.gt.f32.partialorder %v826, 0.0
        %vm1017 = vcmp.gt.f32.partialorder %v891, 0.0
        %vm1018 = vcmp.gt.f32.partialorder %v956, 0.0
        %vm1019 = vcmp.gt.f32.partialorder %v764, 0.0
        %vm1020 = vcmp.gt.f32.partialorder %v829, 0.0
        %vm1021 = vcmp.gt.f32.partialorder %v894, 0.0
        %vm1022 = vcmp.gt.f32.partialorder %v959, 0.0
        %vm1023 = vcmp.gt.f32.partialorder %v767, 0.0
        %vm1024 = vcmp.gt.f32.partialorder %v832, 0.0
        %vm1025 = vcmp.gt.f32.partialorder %v897, 0.0
        %vm1026 = vcmp.gt.f32.partialorder %v962, 0.0
        %vm1027 = vcmp.gt.f32.partialorder %v770, 0.0
        %vm1028 = vcmp.gt.f32.partialorder %v835, 0.0
        %vm1029 = vcmp.gt.f32.partialorder %v900, 0.0
        %vm1030 = vcmp.gt.f32.partialorder %v965, 0.0
        %v1031 = vmul.f32 %v725, 0.1
        %v1032 = vmul.f32 %v790, 0.1
        %v1033 = vmul.f32 %v855, 0.1
        %v1034 = vmul.f32 %v920, 0.1
        %v1035 = vmul.f32 %v728, 0.1
        %v1036 = vmul.f32 %v793, 0.1
        %v1037 = vmul.f32 %v858, 0.1
        %v1038 = vmul.f32 %v923, 0.1
        %v1039 = vmul.f32 %v731, 0.1
        %v1040 = vmul.f32 %v796, 0.1
        %v1041 = vmul.f32 %v861, 0.1
        %v1042 = vmul.f32 %v926, 0.1
        %v1043 = vmul.f32 %v734, 0.1
        %v1044 = vmul.f32 %v799, 0.1
        %v1045 = vmul.f32 %v864, 0.1
        %v1046 = vmul.f32 %v929, 0.1
        %v1047 = vmul.f32 %v737, 0.1
        %v1048 = vmul.f32 %v802, 0.1
        %v1049 = vmul.f32 %v867, 0.1
        %v1050 = vmul.f32 %v932, 0.1
        %v1051 = vmul.f32 %v740, 0.1
        %v1052 = vmul.f32 %v805, 0.1
        %v1053 = vmul.f32 %v870, 0.1
        %v1054 = vmul.f32 %v935, 0.1
        %v1055 = vmul.f32 %v743, 0.1
        %v1056 = vmul.f32 %v808, 0.1
        %v1057 = vmul.f32 %v873, 0.1
        %v1058 = vmul.f32 %v938, 0.1
        %v1059 = vmul.f32 %v746, 0.1
        %v1060 = vmul.f32 %v811, 0.1
        %v1061 = vmul.f32 %v876, 0.1
        %v1062 = vmul.f32 %v941, 0.1
        %v1063 = vmul.f32 %v749, 0.1
        %v1064 = vmul.f32 %v814, 0.1
        %v1065 = vmul.f32 %v879, 0.1
        %v1066 = vmul.f32 %v944, 0.1
        %v1067 = vmul.f32 %v752, 0.1
        %v1068 = vmul.f32 %v817, 0.1
        %v1069 = vmul.f32 %v882, 0.1
        %v1070 = vmul.f32 %v947, 0.1
        %v1071 = vmul.f32 %v755, 0.1
        %v1072 = vmul.f32 %v820, 0.1
        %v1073 = vmul.f32 %v885, 0.1
        %v1074 = vmul.f32 %v950, 0.1
        %v1075 = vmul.f32 %v758, 0.1
        %v1076 = vmul.f32 %v823, 0.1
        %v1077 = vmul.f32 %v888, 0.1
        %v1078 = vmul.f32 %v953, 0.1
        %v1079 = vmul.f32 %v761, 0.1
        %v1080 = vmul.f32 %v826, 0.1
        %v1081 = vmul.f32 %v891, 0.1
        %v1082 = vmul.f32 %v956, 0.1
        %v1083 = vmul.f32 %v764, 0.1
        %v1084 = vmul.f32 %v829, 0.1
        %v1085 = vmul.f32 %v894, 0.1
        %v1086 = vmul.f32 %v959, 0.1
        %v1087 = vmul.f32 %v767, 0.1
        %v1088 = vmul.f32 %v832, 0.1
        %v1089 = vmul.f32 %v897, 0.1
        %v1090 = vmul.f32 %v962, 0.1
        %v1091 = vmul.f32 %v770, 0.1
        %v1092 = vmul.f32 %v835, 0.1
        %v1093 = vmul.f32 %v900, 0.1
        %v1094 = vmul.f32 %v965, 0.1
        %v1095 = vsel %vm967, %v725, %v1031
        %v1096 = vsel %vm968, %v790, %v1032
        %v1097 = vsel %vm969, %v855, %v1033
        %v1098 = vsel %vm970, %v920, %v1034
        %v1099 = vsel %vm971, %v728, %v1035
        %v1100 = vsel %vm972, %v793, %v1036
        %v1101 = vsel %vm973, %v858, %v1037
        %v1102 = vsel %vm974, %v923, %v1038
        %v1103 = vsel %vm975, %v731, %v1039
        %v1104 = vsel %vm976, %v796, %v1040
        %v1105 = vsel %vm977, %v861, %v1041
        %v1106 = vsel %vm978, %v926, %v1042
        %v1107 = vsel %vm979, %v734, %v1043
        %v1108 = vsel %vm980, %v799, %v1044
        %v1109 = vsel %vm981, %v864, %v1045
        %v1110 = vsel %vm982, %v929, %v1046
        %v1111 = vsel %vm983, %v737, %v1047
        %v1112 = vsel %vm984, %v802, %v1048
        %v1113 = vsel %vm985, %v867, %v1049
        %v1114 = vsel %vm986, %v932, %v1050
        %v1115 = vsel %vm987, %v740, %v1051
        %v1116 = vsel %vm988, %v805, %v1052
        %v1117 = vsel %vm989, %v870, %v1053
        %v1118 = vsel %vm990, %v935, %v1054
        %v1119 = vsel %vm991, %v743, %v1055
        %v1120 = vsel %vm992, %v808, %v1056
        %v1121 = vsel %vm993, %v873, %v1057
        %v1122 = vsel %vm994, %v938, %v1058
        %v1123 = vsel %vm995, %v746, %v1059
        %v1124 = vsel %vm996, %v811, %v1060
        %v1125 = vsel %vm997, %v876, %v1061
        %v1126 = vsel %vm998, %v941, %v1062
        %v1127 = vsel %vm999, %v749, %v1063
        %v1128 = vsel %vm1000, %v814, %v1064
        %v1129 = vsel %vm1001, %v879, %v1065
        %v1130 = vsel %vm1002, %v944, %v1066
        %v1131 = vsel %vm1003, %v752, %v1067
        %v1132 = vsel %vm1004, %v817, %v1068
        %v1133 = vsel %vm1005, %v882, %v1069
        %v1134 = vsel %vm1006, %v947, %v1070
        %v1135 = vsel %vm1007, %v755, %v1071
        %v1136 = vsel %vm1008, %v820, %v1072
        %v1137 = vsel %vm1009, %v885, %v1073
        %v1138 = vsel %vm1010, %v950, %v1074
        %v1139 = vsel %vm1011, %v758, %v1075
        %v1140 = vsel %vm1012, %v823, %v1076
        %v1141 = vsel %vm1013, %v888, %v1077
        %v1142 = vsel %vm1014, %v953, %v1078
        %v1143 = vsel %vm1015, %v761, %v1079
        %v1144 = vsel %vm1016, %v826, %v1080
        %v1145 = vsel %vm1017, %v891, %v1081
        %v1146 = vsel %vm1018, %v956, %v1082
        %v1147 = vsel %vm1019, %v764, %v1083
        %v1148 = vsel %vm1020, %v829, %v1084
        %v1149 = vsel %vm1021, %v894, %v1085
        %v1150 = vsel %vm1022, %v959, %v1086
        %v1151 = vsel %vm1023, %v767, %v1087
        %v1152 = vsel %vm1024, %v832, %v1088
        %v1153 = vsel %vm1025, %v897, %v1089
        %v1154 = vsel %vm1026, %v962, %v1090
        %v1155 = vsel %vm1027, %v770, %v1091
        %v1156 = vsel %vm1028, %v835, %v1092
        %v1157 = vsel %vm1029, %v900, %v1093
        %v1158 = vsel %vm1030, %v965, %v1094
        %v1159 = vld [vmem:[%s3] sm:$0xff]
        %v1160 = vld [vmem:[%s3 + $0x8] sm:$0xff]
        %v1161 = vld [vmem:[%s3 + $0x10] sm:$0xff]
        %v1162 = vld [vmem:[%s3 + $0x18] sm:$0xff]
        %v1163 = vld [vmem:[%s3 + $0x20] sm:$0xff]
        %v1164 = vld [vmem:[%s3 + $0x28] sm:$0xff]
        %v1165 = vld [vmem:[%s3 + $0x30] sm:$0xff]
        %v1166 = vld [vmem:[%s3 + $0x38] sm:$0xff]
        %v1167 = vld [vmem:[%s4] sm:$0xff]
        %v1168 = vld [vmem:[%s4 + $0x8] sm:$0xff]
        %v1169 = vld [vmem:[%s4 + $0x10] sm:$0xff]
        %v1170 = vld [vmem:[%s4 + $0x18] sm:$0xff]
        %v1171 = vld [vmem:[%s4 + $0x20] sm:$0xff]
        %v1172 = vld [vmem:[%s4 + $0x28] sm:$0xff]
        %v1173 = vld [vmem:[%s4 + $0x30] sm:$0xff]
        %v1174 = vld [vmem:[%s4 + $0x38] sm:$0xff]
        %1176 = vset.pattern.permute.xlu0 0
        %1177 = vperm.xlu0 %1176, %v1167
        %v1178 = vpop.permute.xlu0 %1177
        %1181 = vset.pattern.permute.xlu0 0
        %1182 = vperm.xlu0 %1181, %v1168
        %v1183 = vpop.permute.xlu0 %1182
        %1186 = vset.pattern.permute.xlu0 0
        %1187 = vperm.xlu0 %1186, %v1169
        %v1188 = vpop.permute.xlu0 %1187
        %1191 = vset.pattern.permute.xlu0 0
        %1192 = vperm.xlu0 %1191, %v1170
        %v1193 = vpop.permute.xlu0 %1192
        %1196 = vset.pattern.permute.xlu0 0
        %1197 = vperm.xlu0 %1196, %v1171
        %v1198 = vpop.permute.xlu0 %1197
        %1201 = vset.pattern.permute.xlu0 0
        %1202 = vperm.xlu0 %1201, %v1172
        %v1203 = vpop.permute.xlu0 %1202
        %1206 = vset.pattern.permute.xlu0 0
        %1207 = vperm.xlu0 %1206, %v1173
        %v1208 = vpop.permute.xlu0 %1207
        %1211 = vset.pattern.permute.xlu0 0
        %1212 = vperm.xlu0 %1211, %v1174
        %v1213 = vpop.permute.xlu0 %1212
        %1215 = vmatpush.msra.mxu0 %v1155
        %1216 = vmatpush.msra.mxu0 %v1151
        %1217 = vmatpush.msra.mxu0 %v1147
        %1218 = vmatpush.msra.mxu0 %v1143
        %1219 = vmatpush.msra.mxu0 %v1139
        %1220 = vmatpush.msra.mxu0 %v1135
        %1221 = vmatpush.msra.mxu0 %v1131
        %1222 = vmatpush.msra.mxu0 %v1127
        %1223 = vmatpush.msra.mxu0 %v1123
        %1224 = vmatpush.msra.mxu0 %v1119
        %1225 = vmatpush.msra.mxu0 %v1115
        %1226 = vmatpush.msra.mxu0 %v1111
        %1227 = vmatpush.msra.mxu0 %v1107
        %1228 = vmatpush.msra.mxu0 %v1103
        %1229 = vmatpush.msra.mxu0 %v1099
        %1230 = vmatpush.msra.mxu0 %v1095
        %1231 = vmatmul.f32.gmra.mxu0 %v1159
        %v1232 = vpop.f32.mrf.mxu0
        %v1233 = vadd.f32 %v1178, %v1232
        %1234 = vmatmul.f32.gmra.mxu0 %v1160
        %v1235 = vpop.f32.mrf.mxu0
        %v1236 = vadd.f32 %v1183, %v1235
        %1237 = vmatmul.f32.gmra.mxu0 %v1161
        %v1238 = vpop.f32.mrf.mxu0
        %v1239 = vadd.f32 %v1188, %v1238
        %1240 = vmatmul.f32.gmra.mxu0 %v1162
        %v1241 = vpop.f32.mrf.mxu0
        %v1242 = vadd.f32 %v1193, %v1241
        %1243 = vmatmul.f32.gmra.mxu0 %v1163
        %v1244 = vpop.f32.mrf.mxu0
        %v1245 = vadd.f32 %v1198, %v1244
        %1246 = vmatmul.f32.gmra.mxu0 %v1164
        %v1247 = vpop.f32.mrf.mxu0
        %v1248 = vadd.f32 %v1203, %v1247
        %1249 = vmatmul.f32.gmra.mxu0 %v1165
        %v1250 = vpop.f32.mrf.mxu0
        %v1251 = vadd.f32 %v1208, %v1250
        %1252 = vmatmul.f32.gmra.mxu0 %v1166
        %v1253 = vpop.f32.mrf.mxu0
        %v1254 = vadd.f32 %v1213, %v1253
        %1255 = vdwg.mxu0
        %1256 = vmatpush.msra.mxu0 %v1156
        %1257 = vmatpush.msra.mxu0 %v1152
        %1258 = vmatpush.msra.mxu0 %v1148
        %1259 = vmatpush.msra.mxu0 %v1144
        %1260 = vmatpush.msra.mxu0 %v1140
        %1261 = vmatpush.msra.mxu0 %v1136
        %1262 = vmatpush.msra.mxu0 %v1132
        %1263 = vmatpush.msra.mxu0 %v1128
        %1264 = vmatpush.msra.mxu0 %v1124
        %1265 = vmatpush.msra.mxu0 %v1120
        %1266 = vmatpush.msra.mxu0 %v1116
        %1267 = vmatpush.msra.mxu0 %v1112
        %1268 = vmatpush.msra.mxu0 %v1108
        %1269 = vmatpush.msra.mxu0 %v1104
        %1270 = vmatpush.msra.mxu0 %v1100
        %1271 = vmatpush.msra.mxu0 %v1096
        %1272 = vmatmul.f32.gmra.mxu0 %v1159
        %v1273 = vpop.f32.mrf.mxu0
        %v1274 = vadd.f32 %v1178, %v1273
        %1275 = vmatmul.f32.gmra.mxu0 %v1160
        %v1276 = vpop.f32.mrf.mxu0
        %v1277 = vadd.f32 %v1183, %v1276
        %1278 = vmatmul.f32.gmra.mxu0 %v1161
        %v1279 = vpop.f32.mrf.mxu0
        %v1280 = vadd.f32 %v1188, %v1279
        %1281 = vmatmul.f32.gmra.mxu0 %v1162
        %v1282 = vpop.f32.mrf.mxu0
        %v1283 = vadd.f32 %v1193, %v1282
        %1284 = vmatmul.f32.gmra.mxu0 %v1163
        %v1285 = vpop.f32.mrf.mxu0
        %v1286 = vadd.f32 %v1198, %v1285
        %1287 = vmatmul.f32.gmra.mxu0 %v1164
        %v1288 = vpop.f32.mrf.mxu0
        %v1289 = vadd.f32 %v1203, %v1288
        %1290 = vmatmul.f32.gmra.mxu0 %v1165
        %v1291 = vpop.f32.mrf.mxu0
        %v1292 = vadd.f32 %v1208, %v1291
        %1293 = vmatmul.f32.gmra.mxu0 %v1166
        %v1294 = vpop.f32.mrf.mxu0
        %v1295 = vadd.f32 %v1213, %v1294
        %1296 = vdwg.mxu0
        %1297 = vmatpush.msra.mxu0 %v1157
        %1298 = vmatpush.msra.mxu0 %v1153
        %1299 = vmatpush.msra.mxu0 %v1149
        %1300 = vmatpush.msra.mxu0 %v1145
        %1301 = vmatpush.msra.mxu0 %v1141
        %1302 = vmatpush.msra.mxu0 %v1137
        %1303 = vmatpush.msra.mxu0 %v1133
        %1304 = vmatpush.msra.mxu0 %v1129
        %1305 = vmatpush.msra.mxu0 %v1125
        %1306 = vmatpush.msra.mxu0 %v1121
        %1307 = vmatpush.msra.mxu0 %v1117
        %1308 = vmatpush.msra.mxu0 %v1113
        %1309 = vmatpush.msra.mxu0 %v1109
        %1310 = vmatpush.msra.mxu0 %v1105
        %1311 = vmatpush.msra.mxu0 %v1101
        %1312 = vmatpush.msra.mxu0 %v1097
        %1313 = vmatmul.f32.gmra.mxu0 %v1159
        %v1314 = vpop.f32.mrf.mxu0
        %v1315 = vadd.f32 %v1178, %v1314
        %1316 = vmatmul.f32.gmra.mxu0 %v1160
        %v1317 = vpop.f32.mrf.mxu0
        %v1318 = vadd.f32 %v1183, %v1317
        %1319 = vmatmul.f32.gmra.mxu0 %v1161
        %v1320 = vpop.f32.mrf.mxu0
        %v1321 = vadd.f32 %v1188, %v1320
        %1322 = vmatmul.f32.gmra.mxu0 %v1162
        %v1323 = vpop.f32.mrf.mxu0
        %v1324 = vadd.f32 %v1193, %v1323
        %1325 = vmatmul.f32.gmra.mxu0 %v1163
        %v1326 = vpop.f32.mrf.mxu0
        %v1327 = vadd.f32 %v1198, %v1326
        %1328 = vmatmul.f32.gmra.mxu0 %v1164
        %v1329 = vpop.f32.mrf.mxu0
        %v1330 = vadd.f32 %v1203, %v1329
        %1331 = vmatmul.f32.gmra.mxu0 %v1165
        %v1332 = vpop.f32.mrf.mxu0
        %v1333 = vadd.f32 %v1208, %v1332
        %1334 = vmatmul.f32.gmra.mxu0 %v1166
        %v1335 = vpop.f32.mrf.mxu0
        %v1336 = vadd.f32 %v1213, %v1335
        %1337 = vdwg.mxu0
        %1338 = vmatpush.msra.mxu0 %v1158
        %1339 = vmatpush.msra.mxu0 %v1154
        %1340 = vmatpush.msra.mxu0 %v1150
        %1341 = vmatpush.msra.mxu0 %v1146
        %1342 = vmatpush.msra.mxu0 %v1142
        %1343 = vmatpush.msra.mxu0 %v1138
        %1344 = vmatpush.msra.mxu0 %v1134
        %1345 = vmatpush.msra.mxu0 %v1130
        %1346 = vmatpush.msra.mxu0 %v1126
        %1347 = vmatpush.msra.mxu0 %v1122
        %1348 = vmatpush.msra.mxu0 %v1118
        %1349 = vmatpush.msra.mxu0 %v1114
        %1350 = vmatpush.msra.mxu0 %v1110
        %1351 = vmatpush.msra.mxu0 %v1106
        %1352 = vmatpush.msra.mxu0 %v1102
        %1353 = vmatpush.msra.mxu0 %v1098
        %1354 = vmatmul.f32.gmra.mxu0 %v1159
        %v1355 = vpop.f32.mrf.mxu0
        %v1356 = vadd.f32 %v1178, %v1355
        %1357 = vmatmul.f32.gmra.mxu0 %v1160
        %v1358 = vpop.f32.mrf.mxu0
        %v1359 = vadd.f32 %v1183, %v1358
        %1360 = vmatmul.f32.gmra.mxu0 %v1161
        %v1361 = vpop.f32.mrf.mxu0
        %v1362 = vadd.f32 %v1188, %v1361
        %1363 = vmatmul.f32.gmra.mxu0 %v1162
        %v1364 = vpop.f32.mrf.mxu0
        %v1365 = vadd.f32 %v1193, %v1364
        %1366 = vmatmul.f32.gmra.mxu0 %v1163
        %v1367 = vpop.f32.mrf.mxu0
        %v1368 = vadd.f32 %v1198, %v1367
        %1369 = vmatmul.f32.gmra.mxu0 %v1164
        %v1370 = vpop.f32.mrf.mxu0
        %v1371 = vadd.f32 %v1203, %v1370
        %1372 = vmatmul.f32.gmra.mxu0 %v1165
        %v1373 = vpop.f32.mrf.mxu0
        %v1374 = vadd.f32 %v1208, %v1373
        %1375 = vmatmul.f32.gmra.mxu0 %v1166
        %v1376 = vpop.f32.mrf.mxu0
        %v1377 = vadd.f32 %v1213, %v1376
        %1378 = vdwg.mxu0
        %vm1379 = vcmp.gt.f32.partialorder %v1233, 0.0
        %vm1380 = vcmp.gt.f32.partialorder %v1274, 0.0
        %vm1381 = vcmp.gt.f32.partialorder %v1315, 0.0
        %vm1382 = vcmp.gt.f32.partialorder %v1356, 0.0
        %vm1383 = vcmp.gt.f32.partialorder %v1236, 0.0
        %vm1384 = vcmp.gt.f32.partialorder %v1277, 0.0
        %vm1385 = vcmp.gt.f32.partialorder %v1318, 0.0
        %vm1386 = vcmp.gt.f32.partialorder %v1359, 0.0
        %vm1387 = vcmp.gt.f32.partialorder %v1239, 0.0
        %vm1388 = vcmp.gt.f32.partialorder %v1280, 0.0
        %vm1389 = vcmp.gt.f32.partialorder %v1321, 0.0
        %vm1390 = vcmp.gt.f32.partialorder %v1362, 0.0
        %vm1391 = vcmp.gt.f32.partialorder %v1242, 0.0
        %vm1392 = vcmp.gt.f32.partialorder %v1283, 0.0
        %vm1393 = vcmp.gt.f32.partialorder %v1324, 0.0
        %vm1394 = vcmp.gt.f32.partialorder %v1365, 0.0
        %vm1395 = vcmp.gt.f32.partialorder %v1245, 0.0
        %vm1396 = vcmp.gt.f32.partialorder %v1286, 0.0
        %vm1397 = vcmp.gt.f32.partialorder %v1327, 0.0
        %vm1398 = vcmp.gt.f32.partialorder %v1368, 0.0
        %vm1399 = vcmp.gt.f32.partialorder %v1248, 0.0
        %vm1400 = vcmp.gt.f32.partialorder %v1289, 0.0
        %vm1401 = vcmp.gt.f32.partialorder %v1330, 0.0
        %vm1402 = vcmp.gt.f32.partialorder %v1371, 0.0
        %vm1403 = vcmp.gt.f32.partialorder %v1251, 0.0
        %vm1404 = vcmp.gt.f32.partialorder %v1292, 0.0
        %vm1405 = vcmp.gt.f32.partialorder %v1333, 0.0
        %vm1406 = vcmp.gt.f32.partialorder %v1374, 0.0
        %vm1407 = vcmp.gt.f32.partialorder %v1254, 0.0
        %vm1408 = vcmp.gt.f32.partialorder %v1295, 0.0
        %vm1409 = vcmp.gt.f32.partialorder %v1336, 0.0
        %vm1410 = vcmp.gt.f32.partialorder %v1377, 0.0
        %v1411 = vmul.f32 %v1233, 0.1
        %v1412 = vmul.f32 %v1274, 0.1
        %v1413 = vmul.f32 %v1315, 0.1
        %v1414 = vmul.f32 %v1356, 0.1
        %v1415 = vmul.f32 %v1236, 0.1
        %v1416 = vmul.f32 %v1277, 0.1
        %v1417 = vmul.f32 %v1318, 0.1
        %v1418 = vmul.f32 %v1359, 0.1
        %v1419 = vmul.f32 %v1239, 0.1
        %v1420 = vmul.f32 %v1280, 0.1
        %v1421 = vmul.f32 %v1321, 0.1
        %v1422 = vmul.f32 %v1362, 0.1
        %v1423 = vmul.f32 %v1242, 0.1
        %v1424 = vmul.f32 %v1283, 0.1
        %v1425 = vmul.f32 %v1324, 0.1
        %v1426 = vmul.f32 %v1365, 0.1
        %v1427 = vmul.f32 %v1245, 0.1
        %v1428 = vmul.f32 %v1286, 0.1
        %v1429 = vmul.f32 %v1327, 0.1
        %v1430 = vmul.f32 %v1368, 0.1
        %v1431 = vmul.f32 %v1248, 0.1
        %v1432 = vmul.f32 %v1289, 0.1
        %v1433 = vmul.f32 %v1330, 0.1
        %v1434 = vmul.f32 %v1371, 0.1
        %v1435 = vmul.f32 %v1251, 0.1
        %v1436 = vmul.f32 %v1292, 0.1
        %v1437 = vmul.f32 %v1333, 0.1
        %v1438 = vmul.f32 %v1374, 0.1
        %v1439 = vmul.f32 %v1254, 0.1
        %v1440 = vmul.f32 %v1295, 0.1
        %v1441 = vmul.f32 %v1336, 0.1
        %v1442 = vmul.f32 %v1377, 0.1
        %v1443 = vsel %vm1379, %v1233, %v1411
        %v1444 = vsel %vm1380, %v1274, %v1412
        %v1445 = vsel %vm1381, %v1315, %v1413
        %v1446 = vsel %vm1382, %v1356, %v1414
        %v1447 = vsel %vm1383, %v1236, %v1415
        %v1448 = vsel %vm1384, %v1277, %v1416
        %v1449 = vsel %vm1385, %v1318, %v1417
        %v1450 = vsel %vm1386, %v1359, %v1418
        %v1451 = vsel %vm1387, %v1239, %v1419
        %v1452 = vsel %vm1388, %v1280, %v1420
        %v1453 = vsel %vm1389, %v1321, %v1421
        %v1454 = vsel %vm1390, %v1362, %v1422
        %v1455 = vsel %vm1391, %v1242, %v1423
        %v1456 = vsel %vm1392, %v1283, %v1424
        %v1457 = vsel %vm1393, %v1324, %v1425
        %v1458 = vsel %vm1394, %v1365, %v1426
        %v1459 = vsel %vm1395, %v1245, %v1427
        %v1460 = vsel %vm1396, %v1286, %v1428
        %v1461 = vsel %vm1397, %v1327, %v1429
        %v1462 = vsel %vm1398, %v1368, %v1430
        %v1463 = vsel %vm1399, %v1248, %v1431
        %v1464 = vsel %vm1400, %v1289, %v1432
        %v1465 = vsel %vm1401, %v1330, %v1433
        %v1466 = vsel %vm1402, %v1371, %v1434
        %v1467 = vsel %vm1403, %v1251, %v1435
        %v1468 = vsel %vm1404, %v1292, %v1436
        %v1469 = vsel %vm1405, %v1333, %v1437
        %v1470 = vsel %vm1406, %v1374, %v1438
        %v1471 = vsel %vm1407, %v1254, %v1439
        %v1472 = vsel %vm1408, %v1295, %v1440
        %v1473 = vsel %vm1409, %v1336, %v1441
        %v1474 = vsel %vm1410, %v1377, %v1442
        %v1475 = vld [vmem:[%s5] sm:$0xff]
        %v1476 = vld [vmem:[%s5 + $0x8] sm:$0xff]
        %v1477 = vld [vmem:[%s6] sm:$0xff]
        %v1478 = vld [vmem:[%s6 + $0x8] sm:$0xff]
        %1480 = vset.pattern.permute.xlu0 0
        %1481 = vperm.xlu0 %1480, %v1477
        %v1482 = vpop.permute.xlu0 %1481
        %1485 = vset.pattern.permute.xlu0 0
        %1486 = vperm.xlu0 %1485, %v1478
        %v1487 = vpop.permute.xlu0 %1486
        %vm1489 = vcmask 523264
        %v1491 = vsel %vm1489, %v1475, 0
        %v1494 = vsel %vm1489, %v1476, 0
        %1496 = vmatpush.msra.mxu0 0.0
        %1497 = vmatpush.msra.mxu0 0.0
        %1498 = vmatpush.msra.mxu0 0.0
        %1499 = vmatpush.msra.mxu0 0.0
        %1500 = vmatpush.msra.mxu0 0.0
        %1501 = vmatpush.msra.mxu0 0.0
        %1502 = vmatpush.msra.mxu0 0.0
        %1503 = vmatpush.msra.mxu0 0.0
        %1504 = vmatpush.msra.mxu0 %v1471
        %1505 = vmatpush.msra.mxu0 %v1467
        %1506 = vmatpush.msra.mxu0 %v1463
        %1507 = vmatpush.msra.mxu0 %v1459
        %1508 = vmatpush.msra.mxu0 %v1455
        %1509 = vmatpush.msra.mxu0 %v1451
        %1510 = vmatpush.msra.mxu0 %v1447
        %1511 = vmatpush.msra.mxu0 %v1443
        %1512 = vmatmul.f32.gmra.mxu0 %v1491
        %v1513 = vpop.f32.mrf.mxu0
        %v1514 = vadd.f32 %v1482, %v1513
        %1515 = vmatmul.f32.gmra.mxu0 %v1494
        %v1516 = vpop.f32.mrf.mxu0
        %v1517 = vadd.f32 %v1487, %v1516
        %1518 = vdwg.mxu0
        %1519 = vmatpush.msra.mxu0 0.0
        %1520 = vmatpush.msra.mxu0 0.0
        %1521 = vmatpush.msra.mxu0 0.0
        %1522 = vmatpush.msra.mxu0 0.0
        %1523 = vmatpush.msra.mxu0 0.0
        %1524 = vmatpush.msra.mxu0 0.0
        %1525 = vmatpush.msra.mxu0 0.0
        %1526 = vmatpush.msra.mxu0 0.0
        %1527 = vmatpush.msra.mxu0 %v1472
        %1528 = vmatpush.msra.mxu0 %v1468
        %1529 = vmatpush.msra.mxu0 %v1464
        %1530 = vmatpush.msra.mxu0 %v1460
        %1531 = vmatpush.msra.mxu0 %v1456
        %1532 = vmatpush.msra.mxu0 %v1452
        %1533 = vmatpush.msra.mxu0 %v1448
        %1534 = vmatpush.msra.mxu0 %v1444
        %1535 = vmatmul.f32.gmra.mxu0 %v1491
        %v1536 = vpop.f32.mrf.mxu0
        %v1537 = vadd.f32 %v1482, %v1536
        %1538 = vmatmul.f32.gmra.mxu0 %v1494
        %v1539 = vpop.f32.mrf.mxu0
        %v1540 = vadd.f32 %v1487, %v1539
        %1541 = vdwg.mxu0
        %1542 = vmatpush.msra.mxu0 0.0
        %1543 = vmatpush.msra.mxu0 0.0
        %1544 = vmatpush.msra.mxu0 0.0
        %1545 = vmatpush.msra.mxu0 0.0
        %1546 = vmatpush.msra.mxu0 0.0
        %1547 = vmatpush.msra.mxu0 0.0
        %1548 = vmatpush.msra.mxu0 0.0
        %1549 = vmatpush.msra.mxu0 0.0
        %1550 = vmatpush.msra.mxu0 %v1473
        %1551 = vmatpush.msra.mxu0 %v1469
        %1552 = vmatpush.msra.mxu0 %v1465
        %1553 = vmatpush.msra.mxu0 %v1461
        %1554 = vmatpush.msra.mxu0 %v1457
        %1555 = vmatpush.msra.mxu0 %v1453
        %1556 = vmatpush.msra.mxu0 %v1449
        %1557 = vmatpush.msra.mxu0 %v1445
        %1558 = vmatmul.f32.gmra.mxu0 %v1491
        %v1559 = vpop.f32.mrf.mxu0
        %v1560 = vadd.f32 %v1482, %v1559
        %1561 = vmatmul.f32.gmra.mxu0 %v1494
        %v1562 = vpop.f32.mrf.mxu0
        %v1563 = vadd.f32 %v1487, %v1562
        %1564 = vdwg.mxu0
        %1565 = vmatpush.msra.mxu0 0.0
        %1566 = vmatpush.msra.mxu0 0.0
        %1567 = vmatpush.msra.mxu0 0.0
        %1568 = vmatpush.msra.mxu0 0.0
        %1569 = vmatpush.msra.mxu0 0.0
        %1570 = vmatpush.msra.mxu0 0.0
        %1571 = vmatpush.msra.mxu0 0.0
        %1572 = vmatpush.msra.mxu0 0.0
        %1573 = vmatpush.msra.mxu0 %v1474
        %1574 = vmatpush.msra.mxu0 %v1470
        %1575 = vmatpush.msra.mxu0 %v1466
        %1576 = vmatpush.msra.mxu0 %v1462
        %1577 = vmatpush.msra.mxu0 %v1458
        %1578 = vmatpush.msra.mxu0 %v1454
        %1579 = vmatpush.msra.mxu0 %v1450
        %1580 = vmatpush.msra.mxu0 %v1446
        %1581 = vmatmul.f32.gmra.mxu0 %v1491
        %v1582 = vpop.f32.mrf.mxu0
        %v1583 = vadd.f32 %v1482, %v1582
        %1584 = vmatmul.f32.gmra.mxu0 %v1494
        %v1585 = vpop.f32.mrf.mxu0
        %v1586 = vadd.f32 %v1487, %v1585
        %1587 = vdwg.mxu0
        %vm1588 = vcmp.gt.f32.partialorder %v1514, 0.0
        %vm1589 = vcmp.gt.f32.partialorder %v1537, 0.0
        %vm1590 = vcmp.gt.f32.partialorder %v1560, 0.0
        %vm1591 = vcmp.gt.f32.partialorder %v1583, 0.0
        %vm1592 = vcmp.gt.f32.partialorder %v1517, 0.0
        %vm1593 = vcmp.gt.f32.partialorder %v1540, 0.0
        %vm1594 = vcmp.gt.f32.partialorder %v1563, 0.0
        %vm1595 = vcmp.gt.f32.partialorder %v1586, 0.0
        %v1596 = vmul.f32 %v1514, 0.1
        %v1597 = vmul.f32 %v1537, 0.1
        %v1598 = vmul.f32 %v1560, 0.1
        %v1599 = vmul.f32 %v1583, 0.1
        %v1600 = vmul.f32 %v1517, 0.1
        %v1601 = vmul.f32 %v1540, 0.1
        %v1602 = vmul.f32 %v1563, 0.1
        %v1603 = vmul.f32 %v1586, 0.1
        %v1604 = vsel %vm1588, %v1514, %v1596
        %v1605 = vsel %vm1589, %v1537, %v1597
        %v1606 = vsel %vm1590, %v1560, %v1598
        %v1607 = vsel %vm1591, %v1583, %v1599
        %v1608 = vsel %vm1592, %v1517, %v1600
        %v1609 = vsel %vm1593, %v1540, %v1601
        %v1610 = vsel %vm1594, %v1563, %v1602
        %v1611 = vsel %vm1595, %v1586, %v1603
        %v1612 = vld [vmem:[%s7] sm:$0xf]
        %v1613 = vld [vmem:[%s8] sm:$0xf]
        %1615 = vset.pattern.permute.xlu0 0
        %1616 = vperm.xlu0 %1615, %v1613
        %v1617 = vpop.permute.xlu0 %1616
        %vm1619 = vcmask 130048
        %v1621 = vsel %vm1619, %v1612, 0
        %1623 = vmatpush.msra.mxu0 0.0
        %1624 = vmatpush.msra.mxu0 0.0
        %1625 = vmatpush.msra.mxu0 0.0
        %1626 = vmatpush.msra.mxu0 0.0
        %1627 = vmatpush.msra.mxu0 0.0
        %1628 = vmatpush.msra.mxu0 0.0
        %1629 = vmatpush.msra.mxu0 0.0
        %1630 = vmatpush.msra.mxu0 0.0
        %1631 = vmatpush.msra.mxu0 0.0
        %1632 = vmatpush.msra.mxu0 0.0
        %1633 = vmatpush.msra.mxu0 0.0
        %1634 = vmatpush.msra.mxu0 0.0
        %1635 = vmatpush.msra.mxu0 0.0
        %1636 = vmatpush.msra.mxu0 0.0
        %1637 = vmatpush.msra.mxu0 %v1608
        %1638 = vmatpush.msra.mxu0 %v1604
        %1639 = vmatmul.f32.gmra.mxu0 %v1621
        %v1640 = vpop.f32.mrf.mxu0
        %v1641 = vadd.f32 %v1617, %v1640
        %1642 = vdwg.mxu0
        %1643 = vmatpush.msra.mxu0 0.0
        %1644 = vmatpush.msra.mxu0 0.0
        %1645 = vmatpush.msra.mxu0 0.0
        %1646 = vmatpush.msra.mxu0 0.0
        %1647 = vmatpush.msra.mxu0 0.0
        %1648 = vmatpush.msra.mxu0 0.0
        %1649 = vmatpush.msra.mxu0 0.0
        %1650 = vmatpush.msra.mxu0 0.0
        %1651 = vmatpush.msra.mxu0 0.0
        %1652 = vmatpush.msra.mxu0 0.0
        %1653 = vmatpush.msra.mxu0 0.0
        %1654 = vmatpush.msra.mxu0 0.0
        %1655 = vmatpush.msra.mxu0 0.0
        %1656 = vmatpush.msra.mxu0 0.0
        %1657 = vmatpush.msra.mxu0 %v1609
        %1658 = vmatpush.msra.mxu0 %v1605
        %1659 = vmatmul.f32.gmra.mxu0 %v1621
        %v1660 = vpop.f32.mrf.mxu0
        %v1661 = vadd.f32 %v1617, %v1660
        %1662 = vdwg.mxu0
        %1663 = vmatpush.msra.mxu0 0.0
        %1664 = vmatpush.msra.mxu0 0.0
        %1665 = vmatpush.msra.mxu0 0.0
        %1666 = vmatpush.msra.mxu0 0.0
        %1667 = vmatpush.msra.mxu0 0.0
        %1668 = vmatpush.msra.mxu0 0.0
        %1669 = vmatpush.msra.mxu0 0.0
        %1670 = vmatpush.msra.mxu0 0.0
        %1671 = vmatpush.msra.mxu0 0.0
        %1672 = vmatpush.msra.mxu0 0.0
        %1673 = vmatpush.msra.mxu0 0.0
        %1674 = vmatpush.msra.mxu0 0.0
        %1675 = vmatpush.msra.mxu0 0.0
        %1676 = vmatpush.msra.mxu0 0.0
        %1677 = vmatpush.msra.mxu0 %v1610
        %1678 = vmatpush.msra.mxu0 %v1606
        %1679 = vmatmul.f32.gmra.mxu0 %v1621
        %v1680 = vpop.f32.mrf.mxu0
        %v1681 = vadd.f32 %v1617, %v1680
        %1682 = vdwg.mxu0
        %1683 = vmatpush.msra.mxu0 0.0
        %1684 = vmatpush.msra.mxu0 0.0
        %1685 = vmatpush.msra.mxu0 0.0
        %1686 = vmatpush.msra.mxu0 0.0
        %1687 = vmatpush.msra.mxu0 0.0
        %1688 = vmatpush.msra.mxu0 0.0
        %1689 = vmatpush.msra.mxu0 0.0
        %1690 = vmatpush.msra.mxu0 0.0
        %1691 = vmatpush.msra.mxu0 0.0
        %1692 = vmatpush.msra.mxu0 0.0
        %1693 = vmatpush.msra.mxu0 0.0
        %1694 = vmatpush.msra.mxu0 0.0
        %1695 = vmatpush.msra.mxu0 0.0
        %1696 = vmatpush.msra.mxu0 0.0
        %1697 = vmatpush.msra.mxu0 %v1611
        %1698 = vmatpush.msra.mxu0 %v1607
        %1699 = vmatmul.f32.gmra.mxu0 %v1621
        %v1700 = vpop.f32.mrf.mxu0
        %v1701 = vadd.f32 %v1617, %v1700
        %1702 = vdwg.mxu0
        %v1703 = vand.u32 2147483647, %v1641
        %v1704 = vand.u32 2147483647, %v1661
        %v1705 = vand.u32 2147483647, %v1681
        %v1706 = vand.u32 2147483647, %v1701
        %vm1707 = vcmask 1043456
        %v1708 = vsel %vm1707, %v1703, 0.0
        %v1709 = vrot.slane %v1708, 4
        %v1710 = vadd.f32 %v1708, %v1709
        %v1711 = vrot.slane %v1710, 2
        %v1712 = vadd.f32 %v1710, %v1711
        %v1713 = vrot.slane %v1712, 1
        %v1714 = vadd.f32 %v1712, %v1713
        %v1715 = vsel %vm1707, %v1704, 0.0
        %v1716 = vrot.slane %v1715, 4
        %v1717 = vadd.f32 %v1715, %v1716
        %v1718 = vrot.slane %v1717, 2
        %v1719 = vadd.f32 %v1717, %v1718
        %v1720 = vrot.slane %v1719, 1
        %v1721 = vadd.f32 %v1719, %v1720
        %v1722 = vsel %vm1707, %v1705, 0.0
        %v1723 = vrot.slane %v1722, 4
        %v1724 = vadd.f32 %v1722, %v1723
        %v1725 = vrot.slane %v1724, 2
        %v1726 = vadd.f32 %v1724, %v1725
        %v1727 = vrot.slane %v1726, 1
        %v1728 = vadd.f32 %v1726, %v1727
        %v1729 = vsel %vm1707, %v1706, 0.0
        %v1730 = vrot.slane %v1729, 4
        %v1731 = vadd.f32 %v1729, %v1730
        %v1732 = vrot.slane %v1731, 2
        %v1733 = vadd.f32 %v1731, %v1732
        %v1734 = vrot.slane %v1733, 1
        %v1735 = vadd.f32 %v1733, %v1734
        %v1736 = vrcp.pop %v1714
        %v1737 = vmul.f32 %v1714, %v1736
        %v1738 = vsub.f32 1.0, %v1737
        %v1739 = vmul.f32 %v1736, %v1738
        %v1740 = vadd.f32 %v1736, %v1739
        %vm1741 = vweird.f32 %v1714
        %vm1742 = vweird.f32 %v1736
        %vm1743 = vmor %vm1741, %vm1742
        %v1744 = vsel %vm1743, %v1736, %v1740
        %v1745 = vand.u32 2147483647, %v1714
        %vm1746 = vcmp.eq.f32.partialorder %v1745, 8.507059e+37
        %v1747 = vand.u32 %v1714, 2147483648
        %v1748 = vor.u32 1.1754944e-38, %v1747
        %v1749 = vsel %vm1746, %v1748, %v1744
        %v1750 = vrcp.pop %v1721
        %v1751 = vmul.f32 %v1721, %v1750
        %v1752 = vsub.f32 1.0, %v1751
        %v1753 = vmul.f32 %v1750, %v1752
        %v1754 = vadd.f32 %v1750, %v1753
        %vm1755 = vweird.f32 %v1721
        %vm1756 = vweird.f32 %v1750
        %vm1757 = vmor %vm1755, %vm1756
        %v1758 = vsel %vm1757, %v1750, %v1754
        %v1759 = vand.u32 2147483647, %v1721
        %vm1760 = vcmp.eq.f32.partialorder %v1759, 8.507059e+37
        %v1761 = vand.u32 %v1721, 2147483648
        %v1762 = vor.u32 1.1754944e-38, %v1761
        %v1763 = vsel %vm1760, %v1762, %v1758
        %v1764 = vrcp.pop %v1728
        %v1765 = vmul.f32 %v1728, %v1764
        %v1766 = vsub.f32 1.0, %v1765
        %v1767 = vmul.f32 %v1764, %v1766
        %v1768 = vadd.f32 %v1764, %v1767
        %vm1769 = vweird.f32 %v1728
        %vm1770 = vweird.f32 %v1764
        %vm1771 = vmor %vm1769, %vm1770
        %v1772 = vsel %vm1771, %v1764, %v1768
        %v1773 = vand.u32 2147483647, %v1728
        %vm1774 = vcmp.eq.f32.partialorder %v1773, 8.507059e+37
        %v1775 = vand.u32 %v1728, 2147483648
        %v1776 = vor.u32 1.1754944e-38, %v1775
        %v1777 = vsel %vm1774, %v1776, %v1772
        %v1778 = vrcp.pop %v1735
        %v1779 = vmul.f32 %v1735, %v1778
        %v1780 = vsub.f32 1.0, %v1779
        %v1781 = vmul.f32 %v1778, %v1780
        %v1782 = vadd.f32 %v1778, %v1781
        %vm1783 = vweird.f32 %v1735
        %vm1784 = vweird.f32 %v1778
        %vm1785 = vmor %vm1783, %vm1784
        %v1786 = vsel %vm1785, %v1778, %v1782
        %v1787 = vand.u32 2147483647, %v1735
        %vm1788 = vcmp.eq.f32.partialorder %v1787, 8.507059e+37
        %v1789 = vand.u32 %v1735, 2147483648
        %v1790 = vor.u32 1.1754944e-38, %v1789
        %v1791 = vsel %vm1788, %v1790, %v1786
        %v1792 = vmul.f32 %v1703, %v1749
        %v1793 = vmul.f32 %v1704, %v1763
        %v1794 = vmul.f32 %v1705, %v1777
        %v1795 = vmul.f32 %v1706, %v1791
        %v1796 = vld [vmem:[%s9] sm:$0xff]
        %v1797 = vld [vmem:[%s9 + $0x8] sm:$0xff]
        %v1798 = vld [vmem:[%s9 + $0x10] sm:$0xff]
        %v1799 = vld [vmem:[%s9 + $0x18] sm:$0xff]
        %v1800 = vld [vmem:[%s10] sm:$0xff]
        %v1801 = vld [vmem:[%s10 + $0x8] sm:$0xff]
        %v1802 = vld [vmem:[%s10 + $0x10] sm:$0xff]
        %v1803 = vld [vmem:[%s10 + $0x18] sm:$0xff]
        %1805 = vset.pattern.permute.xlu0 0
        %1806 = vperm.xlu0 %1805, %v1800
        %v1807 = vpop.permute.xlu0 %1806
        %1810 = vset.pattern.permute.xlu0 0
        %1811 = vperm.xlu0 %1810, %v1801
        %v1812 = vpop.permute.xlu0 %1811
        %1815 = vset.pattern.permute.xlu0 0
        %1816 = vperm.xlu0 %1815, %v1802
        %v1817 = vpop.permute.xlu0 %1816
        %1820 = vset.pattern.permute.xlu0 0
        %1821 = vperm.xlu0 %1820, %v1803
        %v1822 = vpop.permute.xlu0 %1821
        %vm1824 = vcmask 31744
        %v1826 = vsel %vm1824, %v1796, 0
        %v1829 = vsel %vm1824, %v1797, 0
        %v1832 = vsel %vm1824, %v1798, 0
        %v1835 = vsel %vm1824, %v1799, 0
        %v1838 = vsel %vm1707, %v1792, 0
        %v1841 = vsel %vm1707, %v1793, 0
        %v1844 = vsel %vm1707, %v1794, 0
        %v1847 = vsel %vm1707, %v1795, 0
        %1849 = vmatpush.msra.mxu0 0.0
        %1850 = vmatpush.msra.mxu0 0.0
        %1851 = vmatpush.msra.mxu0 0.0
        %1852 = vmatpush.msra.mxu0 0.0
        %1853 = vmatpush.msra.mxu0 0.0
        %1854 = vmatpush.msra.mxu0 0.0
        %1855 = vmatpush.msra.mxu0 0.0
        %1856 = vmatpush.msra.mxu0 0.0
        %1857 = vmatpush.msra.mxu0 0.0
        %1858 = vmatpush.msra.mxu0 0.0
        %1859 = vmatpush.msra.mxu0 0.0
        %1860 = vmatpush.msra.mxu0 0.0
        %1861 = vmatpush.msra.mxu0 0.0
        %1862 = vmatpush.msra.mxu0 0.0
        %1863 = vmatpush.msra.mxu0 0.0
        %1864 = vmatpush.msra.mxu0 %v1838
        %1865 = vmatmul.f32.gmra.mxu0 %v1826
        %v1866 = vpop.f32.mrf.mxu0
        %v1867 = vadd.f32 %v1807, %v1866
        %1868 = vmatmul.f32.gmra.mxu0 %v1829
        %v1869 = vpop.f32.mrf.mxu0
        %v1870 = vadd.f32 %v1812, %v1869
        %1871 = vmatmul.f32.gmra.mxu0 %v1832
        %v1872 = vpop.f32.mrf.mxu0
        %v1873 = vadd.f32 %v1817, %v1872
        %1874 = vmatmul.f32.gmra.mxu0 %v1835
        %v1875 = vpop.f32.mrf.mxu0
        %v1876 = vadd.f32 %v1822, %v1875
        %1877 = vdwg.mxu0
        %1878 = vmatpush.msra.mxu0 0.0
        %1879 = vmatpush.msra.mxu0 0.0
        %1880 = vmatpush.msra.mxu0 0.0
        %1881 = vmatpush.msra.mxu0 0.0
        %1882 = vmatpush.msra.mxu0 0.0
        %1883 = vmatpush.msra.mxu0 0.0
        %1884 = vmatpush.msra.mxu0 0.0
        %1885 = vmatpush.msra.mxu0 0.0
        %1886 = vmatpush.msra.mxu0 0.0
        %1887 = vmatpush.msra.mxu0 0.0
        %1888 = vmatpush.msra.mxu0 0.0
        %1889 = vmatpush.msra.mxu0 0.0
        %1890 = vmatpush.msra.mxu0 0.0
        %1891 = vmatpush.msra.mxu0 0.0
        %1892 = vmatpush.msra.mxu0 0.0
        %1893 = vmatpush.msra.mxu0 %v1841
        %1894 = vmatmul.f32.gmra.mxu0 %v1826
        %v1895 = vpop.f32.mrf.mxu0
        %v1896 = vadd.f32 %v1807, %v1895
        %1897 = vmatmul.f32.gmra.mxu0 %v1829
        %v1898 = vpop.f32.mrf.mxu0
        %v1899 = vadd.f32 %v1812, %v1898
        %1900 = vmatmul.f32.gmra.mxu0 %v1832
        %v1901 = vpop.f32.mrf.mxu0
        %v1902 = vadd.f32 %v1817, %v1901
        %1903 = vmatmul.f32.gmra.mxu0 %v1835
        %v1904 = vpop.f32.mrf.mxu0
        %v1905 = vadd.f32 %v1822, %v1904
        %1906 = vdwg.mxu0
        %1907 = vmatpush.msra.mxu0 0.0
        %1908 = vmatpush.msra.mxu0 0.0
        %1909 = vmatpush.msra.mxu0 0.0
        %1910 = vmatpush.msra.mxu0 0.0
        %1911 = vmatpush.msra.mxu0 0.0
        %1912 = vmatpush.msra.mxu0 0.0
        %1913 = vmatpush.msra.mxu0 0.0
        %1914 = vmatpush.msra.mxu0 0.0
        %1915 = vmatpush.msra.mxu0 0.0
        %1916 = vmatpush.msra.mxu0 0.0
        %1917 = vmatpush.msra.mxu0 0.0
        %1918 = vmatpush.msra.mxu0 0.0
        %1919 = vmatpush.msra.mxu0 0.0
        %1920 = vmatpush.msra.mxu0 0.0
        %1921 = vmatpush.msra.mxu0 0.0
        %1922 = vmatpush.msra.mxu0 %v1844
        %1923 = vmatmul.f32.gmra.mxu0 %v1826
        %v1924 = vpop.f32.mrf.mxu0
        %v1925 = vadd.f32 %v1807, %v1924
        %1926 = vmatmul.f32.gmra.mxu0 %v1829
        %v1927 = vpop.f32.mrf.mxu0
        %v1928 = vadd.f32 %v1812, %v1927
        %1929 = vmatmul.f32.gmra.mxu0 %v1832
        %v1930 = vpop.f32.mrf.mxu0
        %v1931 = vadd.f32 %v1817, %v1930
        %1932 = vmatmul.f32.gmra.mxu0 %v1835
        %v1933 = vpop.f32.mrf.mxu0
        %v1934 = vadd.f32 %v1822, %v1933
        %1935 = vdwg.mxu0
        %1936 = vmatpush.msra.mxu0 0.0
        %1937 = vmatpush.msra.mxu0 0.0
        %1938 = vmatpush.msra.mxu0 0.0
        %1939 = vmatpush.msra.mxu0 0.0
        %1940 = vmatpush.msra.mxu0 0.0
        %1941 = vmatpush.msra.mxu0 0.0
        %1942 = vmatpush.msra.mxu0 0.0
        %1943 = vmatpush.msra.mxu0 0.0
        %1944 = vmatpush.msra.mxu0 0.0
        %1945 = vmatpush.msra.mxu0 0.0
        %1946 = vmatpush.msra.mxu0 0.0
        %1947 = vmatpush.msra.mxu0 0.0
        %1948 = vmatpush.msra.mxu0 0.0
        %1949 = vmatpush.msra.mxu0 0.0
        %1950 = vmatpush.msra.mxu0 0.0
        %1951 = vmatpush.msra.mxu0 %v1847
        %1952 = vmatmul.f32.gmra.mxu0 %v1826
        %v1953 = vpop.f32.mrf.mxu0
        %v1954 = vadd.f32 %v1807, %v1953
        %1955 = vmatmul.f32.gmra.mxu0 %v1829
        %v1956 = vpop.f32.mrf.mxu0
        %v1957 = vadd.f32 %v1812, %v1956
        %1958 = vmatmul.f32.gmra.mxu0 %v1832
        %v1959 = vpop.f32.mrf.mxu0
        %v1960 = vadd.f32 %v1817, %v1959
        %1961 = vmatmul.f32.gmra.mxu0 %v1835
        %v1962 = vpop.f32.mrf.mxu0
        %v1963 = vadd.f32 %v1822, %v1962
        %1964 = vdwg.mxu0
        %v1965 = vxor.u32 %v1867, 2147483648
        %v1966 = vxor.u32 %v1896, 2147483648
        %v1967 = vxor.u32 %v1925, 2147483648
        %v1968 = vxor.u32 %v1954, 2147483648
        %v1969 = vxor.u32 %v1870, 2147483648
        %v1970 = vxor.u32 %v1899, 2147483648
        %v1971 = vxor.u32 %v1928, 2147483648
        %v1972 = vxor.u32 %v1957, 2147483648
        %v1973 = vxor.u32 %v1873, 2147483648
        %v1974 = vxor.u32 %v1902, 2147483648
        %v1975 = vxor.u32 %v1931, 2147483648
        %v1976 = vxor.u32 %v1960, 2147483648
        %v1977 = vxor.u32 %v1876, 2147483648
        %v1978 = vxor.u32 %v1905, 2147483648
        %v1979 = vxor.u32 %v1934, 2147483648
        %v1980 = vxor.u32 %v1963, 2147483648
        %v1981 = vmul.f32 %v1965, 1.442695
        %v1982 = vpow.pop %v1981
        %v1983 = vmul.f32 %v1966, 1.442695
        %v1984 = vpow.pop %v1983
        %v1985 = vmul.f32 %v1967, 1.442695
        %v1986 = vpow.pop %v1985
        %v1987 = vmul.f32 %v1968, 1.442695
        %v1988 = vpow.pop %v1987
        %v1989 = vmul.f32 %v1969, 1.442695
        %v1990 = vpow.pop %v1989
        %v1991 = vmul.f32 %v1970, 1.442695
        %v1992 = vpow.pop %v1991
        %v1993 = vmul.f32 %v1971, 1.442695
        %v1994 = vpow.pop %v1993
        %v1995 = vmul.f32 %v1972, 1.442695
        %v1996 = vpow.pop %v1995
        %v1997 = vmul.f32 %v1973, 1.442695
        %v1998 = vpow.pop %v1997
        %v1999 = vmul.f32 %v1974, 1.442695
        %v2000 = vpow.pop %v1999
        %v2001 = vmul.f32 %v1975, 1.442695
        %v2002 = vpow.pop %v2001
        %v2003 = vmul.f32 %v1976, 1.442695
        %v2004 = vpow.pop %v2003
        %v2005 = vmul.f32 %v1977, 1.442695
        %v2006 = vpow.pop %v2005
        %v2007 = vmul.f32 %v1978, 1.442695
        %v2008 = vpow.pop %v2007
        %v2009 = vmul.f32 %v1979, 1.442695
        %v2010 = vpow.pop %v2009
        %v2011 = vmul.f32 %v1980, 1.442695
        %v2012 = vpow.pop %v2011
        %v2013 = vadd.f32 %v1982, 1.0
        %v2014 = vadd.f32 %v1984, 1.0
        %v2015 = vadd.f32 %v1986, 1.0
        %v2016 = vadd.f32 %v1988, 1.0
        %v2017 = vadd.f32 %v1990, 1.0
        %v2018 = vadd.f32 %v1992, 1.0
        %v2019 = vadd.f32 %v1994, 1.0
        %v2020 = vadd.f32 %v1996, 1.0
        %v2021 = vadd.f32 %v1998, 1.0
        %v2022 = vadd.f32 %v2000, 1.0
        %v2023 = vadd.f32 %v2002, 1.0
        %v2024 = vadd.f32 %v2004, 1.0
        %v2025 = vadd.f32 %v2006, 1.0
        %v2026 = vadd.f32 %v2008, 1.0
        %v2027 = vadd.f32 %v2010, 1.0
        %v2028 = vadd.f32 %v2012, 1.0
        %v2029 = vrcp.pop %v2013
        %v2030 = vmul.f32 %v2013, %v2029
        %v2031 = vsub.f32 1.0, %v2030
        %v2032 = vmul.f32 %v2029, %v2031
        %v2033 = vadd.f32 %v2029, %v2032
        %vm2034 = vweird.f32 %v2013
        %vm2035 = vweird.f32 %v2029
        %vm2036 = vmor %vm2034, %vm2035
        %v2037 = vsel %vm2036, %v2029, %v2033
        %v2038 = vand.u32 2147483647, %v2013
        %vm2039 = vcmp.eq.f32.partialorder %v2038, 8.507059e+37
        %v2040 = vand.u32 %v2013, 2147483648
        %v2041 = vor.u32 1.1754944e-38, %v2040
        %v2042 = vsel %vm2039, %v2041, %v2037
        %v2043 = vmul.f32 1.0, %v2042
        %v2044 = vrcp.pop %v2014
        %v2045 = vmul.f32 %v2014, %v2044
        %v2046 = vsub.f32 1.0, %v2045
        %v2047 = vmul.f32 %v2044, %v2046
        %v2048 = vadd.f32 %v2044, %v2047
        %vm2049 = vweird.f32 %v2014
        %vm2050 = vweird.f32 %v2044
        %vm2051 = vmor %vm2049, %vm2050
        %v2052 = vsel %vm2051, %v2044, %v2048
        %v2053 = vand.u32 2147483647, %v2014
        %vm2054 = vcmp.eq.f32.partialorder %v2053, 8.507059e+37
        %v2055 = vand.u32 %v2014, 2147483648
        %v2056 = vor.u32 1.1754944e-38, %v2055
        %v2057 = vsel %vm2054, %v2056, %v2052
        %v2058 = vmul.f32 1.0, %v2057
        %v2059 = vrcp.pop %v2015
        %v2060 = vmul.f32 %v2015, %v2059
        %v2061 = vsub.f32 1.0, %v2060
        %v2062 = vmul.f32 %v2059, %v2061
        %v2063 = vadd.f32 %v2059, %v2062
        %vm2064 = vweird.f32 %v2015
        %vm2065 = vweird.f32 %v2059
        %vm2066 = vmor %vm2064, %vm2065
        %v2067 = vsel %vm2066, %v2059, %v2063
        %v2068 = vand.u32 2147483647, %v2015
        %vm2069 = vcmp.eq.f32.partialorder %v2068, 8.507059e+37
        %v2070 = vand.u32 %v2015, 2147483648
        %v2071 = vor.u32 1.1754944e-38, %v2070
        %v2072 = vsel %vm2069, %v2071, %v2067
        %v2073 = vmul.f32 1.0, %v2072
        %v2074 = vrcp.pop %v2016
        %v2075 = vmul.f32 %v2016, %v2074
        %v2076 = vsub.f32 1.0, %v2075
        %v2077 = vmul.f32 %v2074, %v2076
        %v2078 = vadd.f32 %v2074, %v2077
        %vm2079 = vweird.f32 %v2016
        %vm2080 = vweird.f32 %v2074
        %vm2081 = vmor %vm2079, %vm2080
        %v2082 = vsel %vm2081, %v2074, %v2078
        %v2083 = vand.u32 2147483647, %v2016
        %vm2084 = vcmp.eq.f32.partialorder %v2083, 8.507059e+37
        %v2085 = vand.u32 %v2016, 2147483648
        %v2086 = vor.u32 1.1754944e-38, %v2085
        %v2087 = vsel %vm2084, %v2086, %v2082
        %v2088 = vmul.f32 1.0, %v2087
        %v2089 = vrcp.pop %v2017
        %v2090 = vmul.f32 %v2017, %v2089
        %v2091 = vsub.f32 1.0, %v2090
        %v2092 = vmul.f32 %v2089, %v2091
        %v2093 = vadd.f32 %v2089, %v2092
        %vm2094 = vweird.f32 %v2017
        %vm2095 = vweird.f32 %v2089
        %vm2096 = vmor %vm2094, %vm2095
        %v2097 = vsel %vm2096, %v2089, %v2093
        %v2098 = vand.u32 2147483647, %v2017
        %vm2099 = vcmp.eq.f32.partialorder %v2098, 8.507059e+37
        %v2100 = vand.u32 %v2017, 2147483648
        %v2101 = vor.u32 1.1754944e-38, %v2100
        %v2102 = vsel %vm2099, %v2101, %v2097
        %v2103 = vmul.f32 1.0, %v2102
        %v2104 = vrcp.pop %v2018
        %v2105 = vmul.f32 %v2018, %v2104
        %v2106 = vsub.f32 1.0, %v2105
        %v2107 = vmul.f32 %v2104, %v2106
        %v2108 = vadd.f32 %v2104, %v2107
        %vm2109 = vweird.f32 %v2018
        %vm2110 = vweird.f32 %v2104
        %vm2111 = vmor %vm2109, %vm2110
        %v2112 = vsel %vm2111, %v2104, %v2108
        %v2113 = vand.u32 2147483647, %v2018
        %vm2114 = vcmp.eq.f32.partialorder %v2113, 8.507059e+37
        %v2115 = vand.u32 %v2018, 2147483648
        %v2116 = vor.u32 1.1754944e-38, %v2115
        %v2117 = vsel %vm2114, %v2116, %v2112
        %v2118 = vmul.f32 1.0, %v2117
        %v2119 = vrcp.pop %v2019
        %v2120 = vmul.f32 %v2019, %v2119
        %v2121 = vsub.f32 1.0, %v2120
        %v2122 = vmul.f32 %v2119, %v2121
        %v2123 = vadd.f32 %v2119, %v2122
        %vm2124 = vweird.f32 %v2019
        %vm2125 = vweird.f32 %v2119
        %vm2126 = vmor %vm2124, %vm2125
        %v2127 = vsel %vm2126, %v2119, %v2123
        %v2128 = vand.u32 2147483647, %v2019
        %vm2129 = vcmp.eq.f32.partialorder %v2128, 8.507059e+37
        %v2130 = vand.u32 %v2019, 2147483648
        %v2131 = vor.u32 1.1754944e-38, %v2130
        %v2132 = vsel %vm2129, %v2131, %v2127
        %v2133 = vmul.f32 1.0, %v2132
        %v2134 = vrcp.pop %v2020
        %v2135 = vmul.f32 %v2020, %v2134
        %v2136 = vsub.f32 1.0, %v2135
        %v2137 = vmul.f32 %v2134, %v2136
        %v2138 = vadd.f32 %v2134, %v2137
        %vm2139 = vweird.f32 %v2020
        %vm2140 = vweird.f32 %v2134
        %vm2141 = vmor %vm2139, %vm2140
        %v2142 = vsel %vm2141, %v2134, %v2138
        %v2143 = vand.u32 2147483647, %v2020
        %vm2144 = vcmp.eq.f32.partialorder %v2143, 8.507059e+37
        %v2145 = vand.u32 %v2020, 2147483648
        %v2146 = vor.u32 1.1754944e-38, %v2145
        %v2147 = vsel %vm2144, %v2146, %v2142
        %v2148 = vmul.f32 1.0, %v2147
        %v2149 = vrcp.pop %v2021
        %v2150 = vmul.f32 %v2021, %v2149
        %v2151 = vsub.f32 1.0, %v2150
        %v2152 = vmul.f32 %v2149, %v2151
        %v2153 = vadd.f32 %v2149, %v2152
        %vm2154 = vweird.f32 %v2021
        %vm2155 = vweird.f32 %v2149
        %vm2156 = vmor %vm2154, %vm2155
        %v2157 = vsel %vm2156, %v2149, %v2153
        %v2158 = vand.u32 2147483647, %v2021
        %vm2159 = vcmp.eq.f32.partialorder %v2158, 8.507059e+37
        %v2160 = vand.u32 %v2021, 2147483648
        %v2161 = vor.u32 1.1754944e-38, %v2160
        %v2162 = vsel %vm2159, %v2161, %v2157
        %v2163 = vmul.f32 1.0, %v2162
        %v2164 = vrcp.pop %v2022
        %v2165 = vmul.f32 %v2022, %v2164
        %v2166 = vsub.f32 1.0, %v2165
        %v2167 = vmul.f32 %v2164, %v2166
        %v2168 = vadd.f32 %v2164, %v2167
        %vm2169 = vweird.f32 %v2022
        %vm2170 = vweird.f32 %v2164
        %vm2171 = vmor %vm2169, %vm2170
        %v2172 = vsel %vm2171, %v2164, %v2168
        %v2173 = vand.u32 2147483647, %v2022
        %vm2174 = vcmp.eq.f32.partialorder %v2173, 8.507059e+37
        %v2175 = vand.u32 %v2022, 2147483648
        %v2176 = vor.u32 1.1754944e-38, %v2175
        %v2177 = vsel %vm2174, %v2176, %v2172
        %v2178 = vmul.f32 1.0, %v2177
        %v2179 = vrcp.pop %v2023
        %v2180 = vmul.f32 %v2023, %v2179
        %v2181 = vsub.f32 1.0, %v2180
        %v2182 = vmul.f32 %v2179, %v2181
        %v2183 = vadd.f32 %v2179, %v2182
        %vm2184 = vweird.f32 %v2023
        %vm2185 = vweird.f32 %v2179
        %vm2186 = vmor %vm2184, %vm2185
        %v2187 = vsel %vm2186, %v2179, %v2183
        %v2188 = vand.u32 2147483647, %v2023
        %vm2189 = vcmp.eq.f32.partialorder %v2188, 8.507059e+37
        %v2190 = vand.u32 %v2023, 2147483648
        %v2191 = vor.u32 1.1754944e-38, %v2190
        %v2192 = vsel %vm2189, %v2191, %v2187
        %v2193 = vmul.f32 1.0, %v2192
        %v2194 = vrcp.pop %v2024
        %v2195 = vmul.f32 %v2024, %v2194
        %v2196 = vsub.f32 1.0, %v2195
        %v2197 = vmul.f32 %v2194, %v2196
        %v2198 = vadd.f32 %v2194, %v2197
        %vm2199 = vweird.f32 %v2024
        %vm2200 = vweird.f32 %v2194
        %vm2201 = vmor %vm2199, %vm2200
        %v2202 = vsel %vm2201, %v2194, %v2198
        %v2203 = vand.u32 2147483647, %v2024
        %vm2204 = vcmp.eq.f32.partialorder %v2203, 8.507059e+37
        %v2205 = vand.u32 %v2024, 2147483648
        %v2206 = vor.u32 1.1754944e-38, %v2205
        %v2207 = vsel %vm2204, %v2206, %v2202
        %v2208 = vmul.f32 1.0, %v2207
        %v2209 = vrcp.pop %v2025
        %v2210 = vmul.f32 %v2025, %v2209
        %v2211 = vsub.f32 1.0, %v2210
        %v2212 = vmul.f32 %v2209, %v2211
        %v2213 = vadd.f32 %v2209, %v2212
        %vm2214 = vweird.f32 %v2025
        %vm2215 = vweird.f32 %v2209
        %vm2216 = vmor %vm2214, %vm2215
        %v2217 = vsel %vm2216, %v2209, %v2213
        %v2218 = vand.u32 2147483647, %v2025
        %vm2219 = vcmp.eq.f32.partialorder %v2218, 8.507059e+37
        %v2220 = vand.u32 %v2025, 2147483648
        %v2221 = vor.u32 1.1754944e-38, %v2220
        %v2222 = vsel %vm2219, %v2221, %v2217
        %v2223 = vmul.f32 1.0, %v2222
        %v2224 = vrcp.pop %v2026
        %v2225 = vmul.f32 %v2026, %v2224
        %v2226 = vsub.f32 1.0, %v2225
        %v2227 = vmul.f32 %v2224, %v2226
        %v2228 = vadd.f32 %v2224, %v2227
        %vm2229 = vweird.f32 %v2026
        %vm2230 = vweird.f32 %v2224
        %vm2231 = vmor %vm2229, %vm2230
        %v2232 = vsel %vm2231, %v2224, %v2228
        %v2233 = vand.u32 2147483647, %v2026
        %vm2234 = vcmp.eq.f32.partialorder %v2233, 8.507059e+37
        %v2235 = vand.u32 %v2026, 2147483648
        %v2236 = vor.u32 1.1754944e-38, %v2235
        %v2237 = vsel %vm2234, %v2236, %v2232
        %v2238 = vmul.f32 1.0, %v2237
        %v2239 = vrcp.pop %v2027
        %v2240 = vmul.f32 %v2027, %v2239
        %v2241 = vsub.f32 1.0, %v2240
        %v2242 = vmul.f32 %v2239, %v2241
        %v2243 = vadd.f32 %v2239, %v2242
        %vm2244 = vweird.f32 %v2027
        %vm2245 = vweird.f32 %v2239
        %vm2246 = vmor %vm2244, %vm2245
        %v2247 = vsel %vm2246, %v2239, %v2243
        %v2248 = vand.u32 2147483647, %v2027
        %vm2249 = vcmp.eq.f32.partialorder %v2248, 8.507059e+37
        %v2250 = vand.u32 %v2027, 2147483648
        %v2251 = vor.u32 1.1754944e-38, %v2250
        %v2252 = vsel %vm2249, %v2251, %v2247
        %v2253 = vmul.f32 1.0, %v2252
        %v2254 = vrcp.pop %v2028
        %v2255 = vmul.f32 %v2028, %v2254
        %v2256 = vsub.f32 1.0, %v2255
        %v2257 = vmul.f32 %v2254, %v2256
        %v2258 = vadd.f32 %v2254, %v2257
        %vm2259 = vweird.f32 %v2028
        %vm2260 = vweird.f32 %v2254
        %vm2261 = vmor %vm2259, %vm2260
        %v2262 = vsel %vm2261, %v2254, %v2258
        %v2263 = vand.u32 2147483647, %v2028
        %vm2264 = vcmp.eq.f32.partialorder %v2263, 8.507059e+37
        %v2265 = vand.u32 %v2028, 2147483648
        %v2266 = vor.u32 1.1754944e-38, %v2265
        %v2267 = vsel %vm2264, %v2266, %v2262
        %v2268 = vmul.f32 1.0, %v2267
        %v2269 = vld [vmem:[%s11] sm:$0xff]
        %v2270 = vld [vmem:[%s11 + $0x8] sm:$0xff]
        %v2271 = vld [vmem:[%s11 + $0x10] sm:$0xff]
        %v2272 = vld [vmem:[%s11 + $0x18] sm:$0xff]
        %v2273 = vld [vmem:[%s12] sm:$0xff]
        %v2274 = vld [vmem:[%s12 + $0x8] sm:$0xff]
        %v2275 = vld [vmem:[%s12 + $0x10] sm:$0xff]
        %v2276 = vld [vmem:[%s12 + $0x18] sm:$0xff]
        %2278 = vset.pattern.permute.xlu0 0
        %2279 = vperm.xlu0 %2278, %v2273
        %v2280 = vpop.permute.xlu0 %2279
        %2283 = vset.pattern.permute.xlu0 0
        %2284 = vperm.xlu0 %2283, %v2274
        %v2285 = vpop.permute.xlu0 %2284
        %2288 = vset.pattern.permute.xlu0 0
        %2289 = vperm.xlu0 %2288, %v2275
        %v2290 = vpop.permute.xlu0 %2289
        %2293 = vset.pattern.permute.xlu0 0
        %2294 = vperm.xlu0 %2293, %v2276
        %v2295 = vpop.permute.xlu0 %2294
        %v2298 = vsel %vm658, %v2269, 0
        %v2301 = vsel %vm658, %v2270, 0
        %v2304 = vsel %vm658, %v2271, 0
        %v2307 = vsel %vm658, %v2272, 0
        %2309 = vmatpush.msra.mxu0 0.0
        %2310 = vmatpush.msra.mxu0 0.0
        %2311 = vmatpush.msra.mxu0 0.0
        %2312 = vmatpush.msra.mxu0 0.0
        %2313 = vmatpush.msra.mxu0 0.0
        %2314 = vmatpush.msra.mxu0 0.0
        %2315 = vmatpush.msra.mxu0 0.0
        %2316 = vmatpush.msra.mxu0 0.0
        %2317 = vmatpush.msra.mxu0 0.0
        %2318 = vmatpush.msra.mxu0 0.0
        %2319 = vmatpush.msra.mxu0 0.0
        %2320 = vmatpush.msra.mxu0 0.0
        %2321 = vmatpush.msra.mxu0 %v2223
        %2322 = vmatpush.msra.mxu0 %v2163
        %2323 = vmatpush.msra.mxu0 %v2103
        %2324 = vmatpush.msra.mxu0 %v2043
        %2325 = vmatmul.f32.gmra.mxu0 %v2298
        %v2326 = vpop.f32.mrf.mxu0
        %v2327 = vadd.f32 %v2280, %v2326
        %2328 = vmatmul.f32.gmra.mxu0 %v2301
        %v2329 = vpop.f32.mrf.mxu0
        %v2330 = vadd.f32 %v2285, %v2329
        %2331 = vmatmul.f32.gmra.mxu0 %v2304
        %v2332 = vpop.f32.mrf.mxu0
        %v2333 = vadd.f32 %v2290, %v2332
        %2334 = vmatmul.f32.gmra.mxu0 %v2307
        %v2335 = vpop.f32.mrf.mxu0
        %v2336 = vadd.f32 %v2295, %v2335
        %2337 = vdwg.mxu0
        %2338 = vmatpush.msra.mxu0 0.0
        %2339 = vmatpush.msra.mxu0 0.0
        %2340 = vmatpush.msra.mxu0 0.0
        %2341 = vmatpush.msra.mxu0 0.0
        %2342 = vmatpush.msra.mxu0 0.0
        %2343 = vmatpush.msra.mxu0 0.0
        %2344 = vmatpush.msra.mxu0 0.0
        %2345 = vmatpush.msra.mxu0 0.0
        %2346 = vmatpush.msra.mxu0 0.0
        %2347 = vmatpush.msra.mxu0 0.0
        %2348 = vmatpush.msra.mxu0 0.0
        %2349 = vmatpush.msra.mxu0 0.0
        %2350 = vmatpush.msra.mxu0 %v2238
        %2351 = vmatpush.msra.mxu0 %v2178
        %2352 = vmatpush.msra.mxu0 %v2118
        %2353 = vmatpush.msra.mxu0 %v2058
        %2354 = vmatmul.f32.gmra.mxu0 %v2298
        %v2355 = vpop.f32.mrf.mxu0
        %v2356 = vadd.f32 %v2280, %v2355
        %2357 = vmatmul.f32.gmra.mxu0 %v2301
        %v2358 = vpop.f32.mrf.mxu0
        %v2359 = vadd.f32 %v2285, %v2358
        %2360 = vmatmul.f32.gmra.mxu0 %v2304
        %v2361 = vpop.f32.mrf.mxu0
        %v2362 = vadd.f32 %v2290, %v2361
        %2363 = vmatmul.f32.gmra.mxu0 %v2307
        %v2364 = vpop.f32.mrf.mxu0
        %v2365 = vadd.f32 %v2295, %v2364
        %2366 = vdwg.mxu0
        %2367 = vmatpush.msra.mxu0 0.0
        %2368 = vmatpush.msra.mxu0 0.0
        %2369 = vmatpush.msra.mxu0 0.0
        %2370 = vmatpush.msra.mxu0 0.0
        %2371 = vmatpush.msra.mxu0 0.0
        %2372 = vmatpush.msra.mxu0 0.0
        %2373 = vmatpush.msra.mxu0 0.0
        %2374 = vmatpush.msra.mxu0 0.0
        %2375 = vmatpush.msra.mxu0 0.0
        %2376 = vmatpush.msra.mxu0 0.0
        %2377 = vmatpush.msra.mxu0 0.0
        %2378 = vmatpush.msra.mxu0 0.0
        %2379 = vmatpush.msra.mxu0 %v2253
        %2380 = vmatpush.msra.mxu0 %v2193
        %2381 = vmatpush.msra.mxu0 %v2133
        %2382 = vmatpush.msra.mxu0 %v2073
        %2383 = vmatmul.f32.gmra.mxu0 %v2298
        %v2384 = vpop.f32.mrf.mxu0
        %v2385 = vadd.f32 %v2280, %v2384
        %2386 = vmatmul.f32.gmra.mxu0 %v2301
        %v2387 = vpop.f32.mrf.mxu0
        %v2388 = vadd.f32 %v2285, %v2387
        %2389 = vmatmul.f32.gmra.mxu0 %v2304
        %v2390 = vpop.f32.mrf.mxu0
        %v2391 = vadd.f32 %v2290, %v2390
        %2392 = vmatmul.f32.gmra.mxu0 %v2307
        %v2393 = vpop.f32.mrf.mxu0
        %v2394 = vadd.f32 %v2295, %v2393
        %2395 = vdwg.mxu0
        %2396 = vmatpush.msra.mxu0 0.0
        %2397 = vmatpush.msra.mxu0 0.0
        %2398 = vmatpush.msra.mxu0 0.0
        %2399 = vmatpush.msra.mxu0 0.0
        %2400 = vmatpush.msra.mxu0 0.0
        %2401 = vmatpush.msra.mxu0 0.0
        %2402 = vmatpush.msra.mxu0 0.0
        %2403 = vmatpush.msra.mxu0 0.0
        %2404 = vmatpush.msra.mxu0 0.0
        %2405 = vmatpush.msra.mxu0 0.0
        %2406 = vmatpush.msra.mxu0 0.0
        %2407 = vmatpush.msra.mxu0 0.0
        %2408 = vmatpush.msra.mxu0 %v2268
        %2409 = vmatpush.msra.mxu0 %v2208
        %2410 = vmatpush.msra.mxu0 %v2148
        %2411 = vmatpush.msra.mxu0 %v2088
        %2412 = vmatmul.f32.gmra.mxu0 %v2298
        %v2413 = vpop.f32.mrf.mxu0
        %v2414 = vadd.f32 %v2280, %v2413
        %2415 = vmatmul.f32.gmra.mxu0 %v2301
        %v2416 = vpop.f32.mrf.mxu0
        %v2417 = vadd.f32 %v2285, %v2416
        %2418 = vmatmul.f32.gmra.mxu0 %v2304
        %v2419 = vpop.f32.mrf.mxu0
        %v2420 = vadd.f32 %v2290, %v2419
        %2421 = vmatmul.f32.gmra.mxu0 %v2307
        %v2422 = vpop.f32.mrf.mxu0
        %v2423 = vadd.f32 %v2295, %v2422
        %2424 = vdwg.mxu0
        %2425 = vst [vmem:[%s519] sm:$0xff] %v2327
        %2426 = vst [vmem:[%s519 + $0x8] sm:$0xff] %v2356
        %2427 = vst [vmem:[%s519 + $0x10] sm:$0xff] %v2385
        %2428 = vst [vmem:[%s519 + $0x18] sm:$0xff] %v2414
        %2429 = vst [vmem:[%s519 + $0x20] sm:$0xff] %v2330
        %2430 = vst [vmem:[%s519 + $0x28] sm:$0xff] %v2359
        %2431 = vst [vmem:[%s519 + $0x30] sm:$0xff] %v2388
        %2432 = vst [vmem:[%s519 + $0x38] sm:$0xff] %v2417
        %2433 = vst [vmem:[%s519 + $0x40] sm:$0xff] %v2333
        %2434 = vst [vmem:[%s519 + $0x48] sm:$0xff] %v2362
        %2435 = vst [vmem:[%s519 + $0x50] sm:$0xff] %v2391
        %2436 = vst [vmem:[%s519 + $0x58] sm:$0xff] %v2420
        %2437 = vst [vmem:[%s519 + $0x60] sm:$0xff] %v2336
        %2438 = vst [vmem:[%s519 + $0x68] sm:$0xff] %v2365
        %2439 = vst [vmem:[%s519 + $0x70] sm:$0xff] %v2394
        %2440 = vst [vmem:[%s519 + $0x78] sm:$0xff] %v2423
        %v2441 = vrot.slane %v1793, 4
        %v2442 = vrot.slane %v1795, 4
        %v2443 = vsel %vm1707, %v1792, %v2441
        %v2444 = vsel %vm1707, %v1794, %v2442
        %2447 = vst [vmem:[%s526] sm:$0xff] %v2443
        %2448 = vst [vmem:[%s526 + $0x8] sm:$0xff] %v2444
        %s2449 = sand.u32 %s318, 1
        %s2450 = scalar_lea.sflag [#allocation4], %s2449
        %s2451 = sand.u32 %s318, 1
        %s2452 = smul.addr %s2451, 128
        %s2453 = scalar_lea.vmem [#allocation3], %s2452
        %s2454 = sand.u32 %s344, 1
        %s2455 = scalar_lea.sflag [#allocation6], %s2454
        %s2456 = sand.u32 %s344, 1
        %s2457 = smul.addr %s2456, 16
        %s2458 = scalar_lea.vmem [#allocation5], %s2457
        // Predicated region
        $region96: #{tpu_custom_call.1} parent=90 // pred_check
          %p2459 = pneg %p328
        $region97: #{tpu_custom_call.1} parent=90 // pred_check_branch
          %2461 = sbr.rel (%p2459) target = $region99
        $region98: #{tpu_custom_call.1} parent=90 // pred_region
          %s2462 = smul.u32 4, %s32
          %2464 = vsyncadd %s2450, 0
          %s2465 = smul.addr %s2462, 8
          %s2466 = scalar_lea.hbm %s13, %s2465
          %s2467 = sshll.u32 %s2453, 4
          %s2468 = int_to_ptr.vmem [resolvable:$true] %s2467
          %s2469 = sshll.u32 %s2466, 4
          %s2470 = int_to_ptr.hbm [resolvable:$true] %s2469
          %2475 = dma.vmem_to_hbm [thread:$0]  %s2468, 2048, %s2470, %s2450, 512, 1024, 32
        $region99: #{tpu_custom_call.1} parent=90 // pred_fallthru
          _
        // Predicated region
        $region100: #{tpu_custom_call.1} parent=90 // pred_check
          %p2476 = pneg %p354
        $region101: #{tpu_custom_call.1} parent=90 // pred_check_branch
          %2478 = sbr.rel (%p2476) target = $region103
        $region102: #{tpu_custom_call.1} parent=90 // pred_region
          %s2479 = smul.u32 4, %s32
          %2481 = vsyncadd %s2455, 0
          %s2482 = smul.addr %s2479, 4
          %s2483 = scalar_lea.hbm %s14, %s2482
          %s2485 = sshll.u32 %s2458, 4
          %s2486 = int_to_ptr.vmem [resolvable:$true] %s2485
          %s2487 = sshll.u32 %s2483, 4
          %s2488 = int_to_ptr.hbm [resolvable:$true] %s2487
          %2490 = dma.vmem_to_hbm [thread:$0]  %s2486, 256, %s2488, %s2455
        $region103: #{tpu_custom_call.1} parent=90 // pred_fallthru
          _
      $region91: #{tpu_custom_call.1} parent=5 // pred_fallthru
        _
      %p2491 = scmp.le.s32.totalorder 2, %s27
      // Predicated region
      $region104: #{tpu_custom_call.1} parent=5 // pred_check
        %p2492 = pneg %p2491
      $region105: #{tpu_custom_call.1} parent=5 // pred_check_branch
        %2494 = sbr.rel (%p2492) target = $region107
      $region106: #{tpu_custom_call.1} parent=5 // pred_region
        %s2495 = ssub.s32 %s27, 2
        // Predicated region
        $region108: #{tpu_custom_call.1} parent=106 // pred_check
          %p2496 = pneg %p334
        $region109: #{tpu_custom_call.1} parent=106 // pred_check_branch
          %2498 = sbr.rel (%p2496) target = $region111
        $region110: #{tpu_custom_call.1} parent=106 // pred_region
          %s2499 = sand.u32 %s319, 1
          %s2500 = scalar_lea.sflag [#allocation4], %s2499
          %s2501 = sand.u32 %s319, 1
          %s2502 = smul.addr %s2501, 128
          %s2503 = scalar_lea.vmem [#allocation3], %s2502
          %2505 = dma.done %s2500, 2048
        $region111: #{tpu_custom_call.1} parent=106 // pred_fallthru
          _
        // Predicated region
        $region112: #{tpu_custom_call.1} parent=106 // pred_check
          %p2506 = pneg %p360
        $region113: #{tpu_custom_call.1} parent=106 // pred_check_branch
          %2508 = sbr.rel (%p2506) target = $region115
        $region114: #{tpu_custom_call.1} parent=106 // pred_region
          %s2509 = sand.u32 %s345, 1
          %s2510 = scalar_lea.sflag [#allocation6], %s2509
          %s2511 = sand.u32 %s345, 1
          %s2512 = smul.addr %s2511, 16
          %s2513 = scalar_lea.vmem [#allocation5], %s2512
          %2515 = dma.done %s2510, 256
        $region115: #{tpu_custom_call.1} parent=106 // pred_fallthru
          _
      $region107: #{tpu_custom_call.1} parent=5 // pred_fallthru
        _
    $region6: #{tpu_custom_call.1} parent=1 // loop_footer
      %s31 = sadd.s32 1, %s27
    $region7: #{tpu_custom_call.1} parent=1 // loop_footer_branch
      %26 = sbr.rel target = $region3
    $region8: #{tpu_custom_call.1} parent=1 // loop_exit
      _
    %2516 = vsyncpa [#allocation4], 1
    %s2517 = scalar_lea.sflag [#allocation4], 1
    %2518 = vsyncpa %s2517, 1
    %2519 = vsyncpa [#allocation6], 1
    %s2520 = scalar_lea.sflag [#allocation6], 1
    %2521 = vsyncpa %s2520, 1

</llo_original>
